<compile_context>
chip_gen: v7x
topology: tpu7x:2x2x1
jax: 0.10.0
libtpu: 0.0.40
codegen_flags: <defaults>
</compile_context>

<pallas_src>
import functools

import jax
import jax.numpy as jnp
from jax import lax
from jax.experimental import pallas as pl
from jax.experimental.pallas import tpu as pltpu

K = 5                 # conv kernel size (both layers)
OC1, OC2 = 6, 16      # channel counts of the module
OC1P, OC2P = 8, 32    # lane-padded channel groups (so phase groups tile 128 lanes)

# Samples per grid step.  Always rounded up to a multiple of 8 so the static
# row shifts inside the kernel stay sublane aligned.  Per-generation guidance:
#   v5e / v6e (128 MiB VMEM, 1 TC): 64-96, vmem_limit ~96 MiB
#   v7x       ( 64 MiB VMEM, 2 TC): ~32, size the batch so the grid has >= 2
#                                   steps to occupy both TensorCores.
TILE_BATCH = 8


def _fused_cnn_kernel(xcols_ref, w1_ref, b1_ref, w2_ref, b2_ref, out_ref,
                      p1_ref, s2_ref, *, tb, wp1, h3):
    """Whole LeNet front end for one batch tile; everything resident in VMEM.

    xcols_ref: (1, hp1*wp1*tb, 64) 8x8 input patches at stride 4, rows ordered
               (c, d, n), lanes = u*8 + v (offset inside the patch).
    w1_ref   : (64, 128) conv1 weights expanded so lane group
               g1 = (r%2)*8 + (s%2)*4 + (r//2)*2 + (s//2)  (conv1 phase (r,s)),
               8 lanes per group (6 valid channels).
    b1_ref   : (1, 32)  conv1 bias tiled over the 4 pool1 phase groups.
    w2_ref   : (288, 128) conv2 weights expanded over 9 (row,col) shifts x
               4 pool1 phases x 8 channels; lane group = pool2 phase p*2+q,
               32 lanes per group (16 valid channels).
    b2_ref   : (1, 16)
    out_ref  : (1, h3*wp1*tb, 16) padded pool2 slab, rows ordered (y, x, n).
    p1_ref   : scratch (hp1*wp1*tb, 32) pooled conv1, lanes = phase*8 + ch.
    s2_ref   : scratch (h3*wp1*tb, 288) conv2 fused-K operand.
    """
    acc_rows = h3 * wp1 * tb

    # ---- conv1: ONE MXU contraction producing all 16 output phases ---------
    y1 = jnp.dot(xcols_ref[0], w1_ref[...], preferred_element_type=jnp.float32)
    # 2x2 maxpool over conv1 phases: lane ordering was chosen so the 4 phases
    # feeding pool group g are {g, g+4, g+8, g+12} -> two halving max passes.
    t = jnp.maximum(y1[:, :64], y1[:, 64:])
    t = jnp.maximum(t[:, :32], t[:, 32:])
    # Bias + ReLU commute with the window max (per-channel constant).
    p1_ref[...] = jnp.maximum(t + b1_ref[...], 0.0)

    # ---- conv2: lay the 9 shifted views side by side, one fused-K matmul ---
    for al in range(3):
        for be in range(3):
            gs = al * 3 + be
            off = (al * wp1 + be) * tb            # static, multiple of 8
            s2_ref[:, gs * 32:(gs + 1) * 32] = p1_ref[off:off + acc_rows, :]
    z = jnp.dot(s2_ref[...], w2_ref[...], preferred_element_type=jnp.float32)
    # 2x2 maxpool over the 4 pool2 phase groups (32 lanes each).
    t = jnp.maximum(z[:, :64], z[:, 64:])
    t = jnp.maximum(t[:, :32], t[:, 32:])
    out_ref[0] = jnp.maximum(t[:, :OC2] + b2_ref[...], 0.0)


def _build_patches(x, tb, hp1, wp1):
    """x: (G*tb, 1, H, W) -> (G, hp1*wp1*tb, 64) stride-4 8x8 input patches.

    patches[g, (c*wp1 + d)*tb + n, u*8 + v] = x[g*tb+n, 0, 4c+u, 4d+v]
    (zero where out of range).  ~4x raw bytes (vs ~29x for a 5x5 stride-1
    im2col) and 64/128 lane dense; pure layout plumbing on the raw input.
    """
    n, _, hh, ww = x.shape
    g = n // tb
    hpad, wpad = 4 * hp1 + 4, 4 * wp1 + 4
    xp = jnp.pad(x[:, 0], ((0, 0), (0, max(0, hpad - hh)), (0, max(0, wpad - ww))))
    cols = [xp[:, u::4, v::4][:, :hp1, :wp1] for u in range(8) for v in range(8)]
    p = jnp.stack(cols, axis=-1)                        # (n, hp1, wp1, 64)
    p = p.reshape(g, tb, hp1, wp1, 64).transpose(0, 2, 3, 1, 4)
    return p.reshape(g, hp1 * wp1 * tb, 64)


def _expand_w1(w1):
    """(OC1,1,5,5) -> (64,128): W[u*8+v, g1*8+oc] = w1[oc,0,u-r,v-s] (else 0)."""
    w = jnp.zeros((8, 8, 16, OC1P), jnp.float32)
    wt = w1[:, 0].transpose(1, 2, 0)                    # (5, 5, OC1)
    for r in range(4):
        for s in range(4):
            g1 = (r % 2) * 8 + (s % 2) * 4 + (r // 2) * 2 + (s // 2)
            w = w.at[r:r + K, s:s + K, g1, :OC1].set(wt)
    return w.reshape(64, 16 * OC1P)


def _expand_w2(w2):
    """(OC2,OC1,5,5) -> (288,128) block-sparse fused-K conv2 weights."""
    w = jnp.zeros((3, 3, 2, 2, OC1P, 2, 2, OC2P), jnp.float32)
    for p in range(2):
        for q in range(2):
            for di in range(K):
                for dj in range(K):
                    u, v = p + di, q + dj
                    al, a = u // 2, u % 2
                    be, b = v // 2, v % 2
                    w = w.at[al, be, a, b, :OC1, p, q, :OC2].set(w2[:, :, di, dj].T)
    return w.reshape(9 * 4 * OC1P, 4 * OC2P)


@functools.partial(jax.jit, static_argnames=("tile_batch",))
def cnn_forward(x, params, tile_batch=TILE_BATCH):
    n, c, hh, ww = x.shape
    assert c == 1, "conv1 expects a single input channel"
    assert params["w1"].shape[0] == OC1 and params["w2"].shape[0] == OC2
    h1, w1sz = hh - K + 1, ww - K + 1                  # conv1 out (24, 24)
    assert h1 % 4 == 0 and w1sz % 4 == 0, "spatial size must keep both pools even"
    h2, w2sz = h1 // 2 - K + 1, w1sz // 2 - K + 1      # conv2 out (8, 8)
    assert h2 > 0 and w2sz > 0 and h2 % 2 == 0 and w2sz % 2 == 0
    h3, w3 = h2 // 2, w2sz // 2                        # pool2 out (4, 4)
    c6h, c6w = h1 // 4, w1sz // 4                      # valid per-phase grid (6, 6)
    assert c6h >= h3 + 2 and c6w >= w3 + 2

    # padded per-phase grid: width needs no padding; height from the conv2
    # shift bound  (2*wp1 + 2) + h3*wp1 <= hp1*wp1  (minimum, per review).
    wp1 = c6w
    hp1 = max(c6h, -(-(2 * wp1 + 2 + h3 * wp1) // wp1))

    tb = -(-max(int(tile_batch), 8) // 8) * 8          # keep row shifts aligned
    g = -(-n // tb)
    npad = g * tb
    if npad != n:
        x = jnp.pad(x, ((0, npad - n), (0, 0), (0, 0), (0, 0)))

    patches = _build_patches(x, tb, hp1, wp1)          # (g, hp1*wp1*tb, 64)
    w1m = _expand_w1(params["w1"])                     # (64, 128)
    w2m = _expand_w2(params["w2"])                     # (288, 128)
    b1m = jnp.tile(jnp.pad(params["b1"], (0, OC1P - OC1)), 4).reshape(1, 4 * OC1P)
    b2m = params["b2"].reshape(1, OC2)

    m1 = hp1 * wp1 * tb
    acc_rows = h3 * wp1 * tb
    kernel = functools.partial(_fused_cnn_kernel, tb=tb, wp1=wp1, h3=h3)
    res = pl.pallas_call(
        kernel,
        out_shape=jax.ShapeDtypeStruct((g, acc_rows, OC2), jnp.float32),
        grid_spec=pltpu.PrefetchScalarGridSpec(
            num_scalar_prefetch=0,
            grid=(g,),
            in_specs=[
                pl.BlockSpec((1, m1, 64), lambda i: (i, 0, 0)),
                pl.BlockSpec((64, 16 * OC1P), lambda i: (0, 0)),
                pl.BlockSpec((1, 4 * OC1P), lambda i: (0, 0)),
                pl.BlockSpec((9 * 4 * OC1P, 4 * OC2P), lambda i: (0, 0)),
                pl.BlockSpec((1, OC2), lambda i: (0, 0)),
            ],
            out_specs=pl.BlockSpec((1, acc_rows, OC2), lambda i: (i, 0, 0)),
            scratch_shapes=[
                pltpu.VMEM((m1, 4 * OC1P), jnp.float32),          # pooled conv1
                pltpu.VMEM((acc_rows, 9 * 4 * OC1P), jnp.float32),  # fused-K op
            ],
        ),
        compiler_params=pltpu.CompilerParams(
            dimension_semantics=("parallel",),
            # ~1-2 MiB/step at tb=8; raise to ~96 MiB on v5e/v6e (or ~48 MiB
            # on v7x) together with TILE_BATCH for large batches.
            vmem_limit_bytes=32 * 1024 * 1024,
        ),
    )(patches, w1m, b1m, w2m, b2m)

    # padded slab (g, y, x, n, oc) -> crop padded x columns -> (n, oc, y, x)
    # -> torch.flatten(start_dim=1).  Free host-side reshape on ~1 KB/sample.
    res = res.reshape(g, h3, wp1, tb, OC2)[:, :, :w3]
    res = res.transpose(0, 3, 4, 1, 2).reshape(npad, OC2 * h3 * w3)
    return res[:n]


def _reference_forward(x, params):
    """Pure-JAX (XLA) reference for correctness checking."""
    def conv(x, w, b):
        y = lax.conv_general_dilated(
            x, w, window_strides=(1, 1), padding="VALID",
            dimension_numbers=("NCHW", "OIHW", "NCHW"),
            precision=lax.Precision.HIGHEST)
        return jnp.maximum(y + b[None, :, None, None], 0.0)

    def pool(x):
        return lax.reduce_window(x, -jnp.inf, lax.max,
                                 (1, 1, 2, 2), (1, 1, 2, 2), "VALID")

    x = pool(conv(x, params["w1"], params["b1"]))
    x = pool(conv(x, params["w2"], params["b2"]))
    return x.reshape(x.shape[0], -1)


def init_params(key):
    k1, k2, k3, k4 = jax.random.split(key, 4)
    return {
        "w1": jax.random.normal(k1, (OC1, 1, 5, 5), jnp.float32) * 0.1,
        "b1": jax.random.normal(k2, (OC1,), jnp.float32) * 0.1,
        "w2": jax.random.normal(k3, (OC2, OC1, 5, 5), jnp.float32) * 0.1,
        "b2": jax.random.normal(k4, (OC2,), jnp.float32) * 0.1,
    }


if __name__ == "__main__":
    key = jax.random.PRNGKey(0)
    pkey, xkey = jax.random.split(key)
    params = init_params(pkey)
    # LeNet-style input: batch=2, 1 channel, 28x28 spatial
    x = jax.random.normal(xkey, (2, 1, 28, 28), jnp.float32)

    out = jax.block_until_ready(cnn_forward(x, params))
    assert out.shape == (2, OC2 * 4 * 4), out.shape

    ref = jax.block_until_ready(_reference_forward(x, params))
    assert jnp.allclose(out, ref, rtol=1e-2, atol=1e-2), \
        float(jnp.max(jnp.abs(out - ref)))

    print("KERNEL_OK")
</pallas_src>

<mosaic_0001>
module attributes {stable_mosaic.version = 11 : i64} {
  func.func @_fused_cnn_kernel(%arg0: i32, %arg1: memref<1x336x64xf32, #tpu.memory_space<vmem>>, %arg2: memref<64x128xf32, #tpu.memory_space<vmem>>, %arg3: memref<1x32xf32, #tpu.memory_space<vmem>>, %arg4: memref<288x128xf32, #tpu.memory_space<vmem>>, %arg5: memref<1x16xf32, #tpu.memory_space<vmem>>, %arg6: memref<1x192x16xf32, #tpu.memory_space<vmem>>, %arg7: memref<336x32xf32, #tpu.memory_space<vmem>>, %arg8: memref<192x288xf32, #tpu.memory_space<vmem>>) attributes {dimension_semantics = [#tpu.dimension_semantics<parallel>], iteration_bounds = array<i64: 1>, scalar_prefetch = 0 : i64, scratch_operands = 2 : i64, tpu.core_type = #tpu.core_type<tc>, window_params = [{transform_indices = @transform_0, window_bounds = array<i64: 1, 336, 64>}, {pipeline_mode = #tpu.pipeline_mode<synchronous>, transform_indices = @transform_1, window_bounds = array<i64: 64, 128>}, {pipeline_mode = #tpu.pipeline_mode<synchronous>, transform_indices = @transform_2, window_bounds = array<i64: 1, 32>}, {pipeline_mode = #tpu.pipeline_mode<synchronous>, transform_indices = @transform_3, window_bounds = array<i64: 288, 128>}, {pipeline_mode = #tpu.pipeline_mode<synchronous>, transform_indices = @transform_4, window_bounds = array<i64: 1, 16>}, {transform_indices = @transform_5, window_bounds = array<i64: 1, 192, 16>}]} {
    %c0 = arith.constant 0 : index
    %c0_0 = arith.constant 0 : index
    %c0_1 = arith.constant 0 : index
    %0 = vector.load %arg1[%c0, %c0_0, %c0_1] : memref<1x336x64xf32, #tpu.memory_space<vmem>>, vector<1x336x64xf32>
    %1 = vector.shape_cast %0 : vector<1x336x64xf32> to vector<336x64xf32>
    %c0_2 = arith.constant 0 : index
    %c0_3 = arith.constant 0 : index
    %2 = vector.load %arg2[%c0_2, %c0_3] : memref<64x128xf32, #tpu.memory_space<vmem>>, vector<64x128xf32>
    %cst = arith.constant dense<0.000000e+00> : vector<336x128xf32>
    %3 = tpu.matmul %1, %2, %cst {dimension_numbers = #tpu.dot_dimension_numbers<[1], [0], [0], [1], [0, 0, 1, 1], [], []>} : vector<336x64xf32>, vector<64x128xf32>, vector<336x128xf32> -> vector<336x128xf32>
    %4 = vector.extract_strided_slice %3 {offsets = [0, 0], sizes = [336, 64], strides = [1, 1]} : vector<336x128xf32> to vector<336x64xf32>
    %5 = vector.extract_strided_slice %3 {offsets = [0, 64], sizes = [336, 64], strides = [1, 1]} : vector<336x128xf32> to vector<336x64xf32>
    %6 = arith.maximumf %4, %5 : vector<336x64xf32>
    %7 = vector.extract_strided_slice %6 {offsets = [0, 0], sizes = [336, 32], strides = [1, 1]} : vector<336x64xf32> to vector<336x32xf32>
    %8 = vector.extract_strided_slice %6 {offsets = [0, 32], sizes = [336, 32], strides = [1, 1]} : vector<336x64xf32> to vector<336x32xf32>
    %9 = arith.maximumf %7, %8 : vector<336x32xf32>
    %c0_4 = arith.constant 0 : index
    %c0_5 = arith.constant 0 : index
    %10 = vector.load %arg3[%c0_4, %c0_5] : memref<1x32xf32, #tpu.memory_space<vmem>>, vector<1x32xf32>
    %11 = vector.broadcast %10 : vector<1x32xf32> to vector<336x32xf32>
    %12 = arith.addf %9, %11 : vector<336x32xf32>
    %cst_6 = arith.constant 0.000000e+00 : f32
    %13 = vector.broadcast %cst_6 : f32 to vector<336x32xf32>
    %14 = arith.maximumf %12, %13 : vector<336x32xf32>
    %c0_7 = arith.constant 0 : index
    %c0_8 = arith.constant 0 : index
    %15 = vector.load %arg7[%c0_7, %c0_8] : memref<336x32xf32, #tpu.memory_space<vmem>>, vector<336x32xf32>
    tpu.vector_store %arg7[%c0_7, %c0_8], %14 {strides = array<i32>} : memref<336x32xf32, #tpu.memory_space<vmem>>, vector<336x32xf32>,
    %c0_9 = arith.constant 0 : index
    %c0_10 = arith.constant 0 : index
    %16 = vector.load %arg7[%c0_9, %c0_10] : memref<336x32xf32, #tpu.memory_space<vmem>>, vector<192x32xf32>
    %c0_11 = arith.constant 0 : index
    %c0_12 = arith.constant 0 : index
    %17 = vector.load %arg8[%c0_11, %c0_12] : memref<192x288xf32, #tpu.memory_space<vmem>>, vector<192x32xf32>
    tpu.vector_store %arg8[%c0_11, %c0_12], %16 {strides = array<i32>} : memref<192x288xf32, #tpu.memory_space<vmem>>, vector<192x32xf32>,
    %c8 = arith.constant 8 : index
    %c0_13 = arith.constant 0 : index
    %18 = vector.load %arg7[%c8, %c0_13] : memref<336x32xf32, #tpu.memory_space<vmem>>, vector<192x32xf32>
    %c0_14 = arith.constant 0 : index
    %c32 = arith.constant 32 : index
    %19 = vector.load %arg8[%c0_14, %c32] : memref<192x288xf32, #tpu.memory_space<vmem>>, vector<192x32xf32>
    tpu.vector_store %arg8[%c0_14, %c32], %18 {strides = array<i32>} : memref<192x288xf32, #tpu.memory_space<vmem>>, vector<192x32xf32>,
    %c16 = arith.constant 16 : index
    %c0_15 = arith.constant 0 : index
    %20 = vector.load %arg7[%c16, %c0_15] : memref<336x32xf32, #tpu.memory_space<vmem>>, vector<192x32xf32>
    %c0_16 = arith.constant 0 : index
    %c64 = arith.constant 64 : index
    %21 = vector.load %arg8[%c0_16, %c64] : memref<192x288xf32, #tpu.memory_space<vmem>>, vector<192x32xf32>
    tpu.vector_store %arg8[%c0_16, %c64], %20 {strides = array<i32>} : memref<192x288xf32, #tpu.memory_space<vmem>>, vector<192x32xf32>,
    %c48 = arith.constant 48 : index
    %c0_17 = arith.constant 0 : index
    %22 = vector.load %arg7[%c48, %c0_17] : memref<336x32xf32, #tpu.memory_space<vmem>>, vector<192x32xf32>
    %c0_18 = arith.constant 0 : index
    %c96 = arith.constant 96 : index
    %23 = vector.load %arg8[%c0_18, %c96] : memref<192x288xf32, #tpu.memory_space<vmem>>, vector<192x32xf32>
    tpu.vector_store %arg8[%c0_18, %c96], %22 {strides = array<i32>} : memref<192x288xf32, #tpu.memory_space<vmem>>, vector<192x32xf32>,
    %c56 = arith.constant 56 : index
    %c0_19 = arith.constant 0 : index
    %24 = vector.load %arg7[%c56, %c0_19] : memref<336x32xf32, #tpu.memory_space<vmem>>, vector<192x32xf32>
    %c0_20 = arith.constant 0 : index
    %c128 = arith.constant 128 : index
    %25 = vector.load %arg8[%c0_20, %c128] : memref<192x288xf32, #tpu.memory_space<vmem>>, vector<192x32xf32>
    tpu.vector_store %arg8[%c0_20, %c128], %24 {strides = array<i32>} : memref<192x288xf32, #tpu.memory_space<vmem>>, vector<192x32xf32>,
    %c64_21 = arith.constant 64 : index
    %c0_22 = arith.constant 0 : index
    %26 = vector.load %arg7[%c64_21, %c0_22] : memref<336x32xf32, #tpu.memory_space<vmem>>, vector<192x32xf32>
    %c0_23 = arith.constant 0 : index
    %c160 = arith.constant 160 : index
    %27 = vector.load %arg8[%c0_23, %c160] : memref<192x288xf32, #tpu.memory_space<vmem>>, vector<192x32xf32>
    tpu.vector_store %arg8[%c0_23, %c160], %26 {strides = array<i32>} : memref<192x288xf32, #tpu.memory_space<vmem>>, vector<192x32xf32>,
    %c96_24 = arith.constant 96 : index
    %c0_25 = arith.constant 0 : index
    %28 = vector.load %arg7[%c96_24, %c0_25] : memref<336x32xf32, #tpu.memory_space<vmem>>, vector<192x32xf32>
    %c0_26 = arith.constant 0 : index
    %c192 = arith.constant 192 : index
    %29 = vector.load %arg8[%c0_26, %c192] : memref<192x288xf32, #tpu.memory_space<vmem>>, vector<192x32xf32>
    tpu.vector_store %arg8[%c0_26, %c192], %28 {strides = array<i32>} : memref<192x288xf32, #tpu.memory_space<vmem>>, vector<192x32xf32>,
    %c104 = arith.constant 104 : index
    %c0_27 = arith.constant 0 : index
    %30 = vector.load %arg7[%c104, %c0_27] : memref<336x32xf32, #tpu.memory_space<vmem>>, vector<192x32xf32>
    %c0_28 = arith.constant 0 : index
    %c224 = arith.constant 224 : index
    %31 = vector.load %arg8[%c0_28, %c224] : memref<192x288xf32, #tpu.memory_space<vmem>>, vector<192x32xf32>
    tpu.vector_store %arg8[%c0_28, %c224], %30 {strides = array<i32>} : memref<192x288xf32, #tpu.memory_space<vmem>>, vector<192x32xf32>,
    %c112 = arith.constant 112 : index
    %c0_29 = arith.constant 0 : index
    %32 = vector.load %arg7[%c112, %c0_29] : memref<336x32xf32, #tpu.memory_space<vmem>>, vector<192x32xf32>
    %c0_30 = arith.constant 0 : index
    %c256 = arith.constant 256 : index
    %33 = vector.load %arg8[%c0_30, %c256] : memref<192x288xf32, #tpu.memory_space<vmem>>, vector<192x32xf32>
    tpu.vector_store %arg8[%c0_30, %c256], %32 {strides = array<i32>} : memref<192x288xf32, #tpu.memory_space<vmem>>, vector<192x32xf32>,
    %c0_31 = arith.constant 0 : index
    %c0_32 = arith.constant 0 : index
    %34 = vector.load %arg8[%c0_31, %c0_32] : memref<192x288xf32, #tpu.memory_space<vmem>>, vector<192x288xf32>
    %c0_33 = arith.constant 0 : index
    %c0_34 = arith.constant 0 : index
    %35 = vector.load %arg4[%c0_33, %c0_34] : memref<288x128xf32, #tpu.memory_space<vmem>>, vector<288x128xf32>
    %cst_35 = arith.constant dense<0.000000e+00> : vector<192x128xf32>
    %36 = tpu.matmul %34, %35, %cst_35 {dimension_numbers = #tpu.dot_dimension_numbers<[1], [0], [0], [1], [0, 0, 1, 1], [], []>} : vector<192x288xf32>, vector<288x128xf32>, vector<192x128xf32> -> vector<192x128xf32>
    %37 = vector.extract_strided_slice %36 {offsets = [0, 0], sizes = [192, 64], strides = [1, 1]} : vector<192x128xf32> to vector<192x64xf32>
    %38 = vector.extract_strided_slice %36 {offsets = [0, 64], sizes = [192, 64], strides = [1, 1]} : vector<192x128xf32> to vector<192x64xf32>
    %39 = arith.maximumf %37, %38 : vector<192x64xf32>
    %40 = vector.extract_strided_slice %39 {offsets = [0, 0], sizes = [192, 32], strides = [1, 1]} : vector<192x64xf32> to vector<192x32xf32>
    %41 = vector.extract_strided_slice %39 {offsets = [0, 32], sizes = [192, 32], strides = [1, 1]} : vector<192x64xf32> to vector<192x32xf32>
    %42 = arith.maximumf %40, %41 : vector<192x32xf32>
    %43 = vector.extract_strided_slice %42 {offsets = [0, 0], sizes = [192, 16], strides = [1, 1]} : vector<192x32xf32> to vector<192x16xf32>
    %c0_36 = arith.constant 0 : index
    %c0_37 = arith.constant 0 : index
    %44 = vector.load %arg5[%c0_36, %c0_37] : memref<1x16xf32, #tpu.memory_space<vmem>>, vector<1x16xf32>
    %45 = vector.broadcast %44 : vector<1x16xf32> to vector<192x16xf32>
    %46 = arith.addf %43, %45 : vector<192x16xf32>
    %cst_38 = arith.constant 0.000000e+00 : f32
    %47 = vector.broadcast %cst_38 : f32 to vector<192x16xf32>
    %48 = arith.maximumf %46, %47 : vector<192x16xf32>
    %c0_39 = arith.constant 0 : index
    %c0_40 = arith.constant 0 : index
    %c0_41 = arith.constant 0 : index
    %49 = vector.load %arg6[%c0_39, %c0_40, %c0_41] : memref<1x192x16xf32, #tpu.memory_space<vmem>>, vector<1x192x16xf32>
    %50 = vector.shape_cast %49 : vector<1x192x16xf32> to vector<192x16xf32>
    %51 = vector.shape_cast %48 : vector<192x16xf32> to vector<1x192x16xf32>
    tpu.vector_store %arg6[%c0_39, %c0_40, %c0_41], %51 {strides = array<i32>} : memref<1x192x16xf32, #tpu.memory_space<vmem>>, vector<1x192x16xf32>,
    return
  }
  func.func @transform_0(%arg0: i32) -> (i32, i32, i32) {
    %c0_i32 = arith.constant 0 : i32
    %c0_i32_0 = arith.constant 0 : i32
    %c0_i32_1 = arith.constant 0 : i32
    return %arg0, %c0_i32, %c0_i32_0 : i32, i32, i32
  }
  func.func @transform_1(%arg0: i32) -> (i32, i32) {
    %c0_i32 = arith.constant 0 : i32
    %c0_i32_0 = arith.constant 0 : i32
    %c0_i32_1 = arith.constant 0 : i32
    return %c0_i32, %c0_i32_0 : i32, i32
  }
  func.func @transform_2(%arg0: i32) -> (i32, i32) {
    %c0_i32 = arith.constant 0 : i32
    %c0_i32_0 = arith.constant 0 : i32
    %c0_i32_1 = arith.constant 0 : i32
    return %c0_i32, %c0_i32_0 : i32, i32
  }
  func.func @transform_3(%arg0: i32) -> (i32, i32) {
    %c0_i32 = arith.constant 0 : i32
    %c0_i32_0 = arith.constant 0 : i32
    %c0_i32_1 = arith.constant 0 : i32
    return %c0_i32, %c0_i32_0 : i32, i32
  }
  func.func @transform_4(%arg0: i32) -> (i32, i32) {
    %c0_i32 = arith.constant 0 : i32
    %c0_i32_0 = arith.constant 0 : i32
    %c0_i32_1 = arith.constant 0 : i32
    return %c0_i32, %c0_i32_0 : i32, i32
  }
  func.func @transform_5(%arg0: i32) -> (i32, i32, i32) {
    %c0_i32 = arith.constant 0 : i32
    %c0_i32_0 = arith.constant 0 : i32
    %c0_i32_1 = arith.constant 0 : i32
    return %arg0, %c0_i32, %c0_i32_0 : i32, i32, i32
  }
}

</mosaic_0001>

<llo_original>
// kernel: tile.8
$region0: #{tile.8}
  #allocation0 [shape = 's32[1]{0}', space=sflag, size = 0x4, scoped, tag = 'scoped memory for tile.8']
  %s0 = inlined_call_operand.vmem [shape: f32[8], index: 0, kind: input, shape index: {}]
  %s1 = inlined_call_operand.vmem [shape: f32[4,8], index: 1, kind: output, shape index: {}]
  // Predicated region
  $region2: #{tile.8} parent=0 // pred_check
    _
  $region3: #{tile.8} parent=0 // pred_check_branch
    %3 = sbr.rel (0) target = $region5
  $region4: #{tile.8} parent=0 // pred_region
    _
  $region5: #{tile.8} parent=0 // pred_fallthru
    _
  %v4 = vld [vmem:[%s0] ss:$0 sm:$0xff]
  %5 = vst [vmem:[%s1] sm:$0xf] %v4

// kernel: tile.9
$region0: #{tile.9}
  %s0 = inlined_call_operand.vmem [shape: f32[4,8], index: 0, kind: input, shape index: {}]
  %s1 = inlined_call_operand.vmem [shape: f32[1,32], index: 1, kind: output, shape index: {}]
  $region1: #{tile.9} parent=0
    #allocation0 [shape = 'u8[4096]{0}', space=vmem, size = 0x1000, scoped, tag = 'scoped mem for output reshape']
    #allocation1 [shape = 'u8[4096]{0}', space=vmem, size = 0x1000, scoped, tag = 'scoped mem for input reshape']
    %s3 = sshllo.u32 0, 4
    %v4 = vld [vmem:[%s0] sm:%s3]
    %5 = vst [vmem:[#allocation1] sm:%s3] %v4
    %v6 = vld [vmem:[#allocation1] sm:$0x1]
    %vm7 = vcmask 64512
    %8 = vst.msk [vmem:[#allocation0] sm:$0x1] %vm7, %v6
    %s9 = scalar_lea.vmem [#allocation1], 3
    %v10 = vld [vmem:[%s9] sm:$0x1]
    %11 = vrot.lane.b32.xlu0 %v10, 24
    %v12 = vpop.permute.xlu0 %11
    %vm13 = vcmask 261312
    %14 = vst.msk [vmem:[#allocation0] sm:$0x1] %vm13, %v12
    %s15 = scalar_lea.vmem [#allocation1], 2
    %v16 = vld [vmem:[%s15] sm:$0x1]
    %17 = vrot.lane.b32.xlu0 %v16, 16
    %v18 = vpop.permute.xlu0 %17
    %vm19 = vcmask 195712
    %20 = vst.msk [vmem:[#allocation0] sm:$0x1] %vm19, %v18
    %s21 = scalar_lea.vmem [#allocation1], 1
    %v22 = vld [vmem:[%s21] sm:$0x1]
    %23 = vrot.lane.b32.xlu0 %v22, 8
    %v24 = vpop.permute.xlu0 %23
    %vm25 = vcmask 130112
    %26 = vst.msk [vmem:[#allocation0] sm:$0x1] %vm25, %v24
    %s28 = sshllo.u32 0, 1
    %v30 = vld [vmem:[#allocation0] sm:%s28]
    %s31 = sshllo.u32 0, 1
    %32 = vst [vmem:[%s1] sm:%s31] %v30

// kernel: cnn_forward.1
$region0: #{cnn_forward.1}
  #allocation0 [shape = 'u32[]', space=smem, size = 0x4, offset = 0x4, fixed_abs, tag = 'smem constant byte address 0x4 - core index']
  #allocation1 [shape = 'u32[144,128]{1,0:T(1,128)}', space=vmem, size = 0x12000, scoped, tag = 'internal scratch']
  #allocation2 [shape = 'f32[336,32]{1,0:T(8,128)}', space=vmem, size = 0x2a000, scoped, tag = 'scratch operand']
  #allocation3 [shape = 'f32[192,288]{1,0:T(8,128)}', space=vmem, size = 0x48000, scoped, tag = 'scratch operand']
  %s0 = inlined_call_operand.vmem [shape: f32[1,336,64], index: 0, kind: input, shape index: {}]
  %s1 = inlined_call_operand.vmem [shape: f32[64,128], index: 1, kind: input, shape index: {}]
  %s2 = inlined_call_operand.vmem [shape: f32[1,32], index: 2, kind: input, shape index: {}]
  %s3 = inlined_call_operand.vmem [shape: f32[288,128], index: 3, kind: input, shape index: {}]
  %s4 = inlined_call_operand.vmem [shape: f32[1,16], index: 4, kind: input, shape index: {}]
  %s5 = inlined_call_operand.vmem [shape: f32[1,192,16], index: 5, kind: output, shape index: {}]
  %s6 = sld [smem:[#allocation0]]
  $region30: #{cnn_forward.1} parent=0
    _
  %s8 = ssub.s32 1, %s6
  %s9 = scalar_select 0, %s8, %s6
  // Predicated region
  $region2: #{cnn_forward.1} parent=0 // pred_check
    _
  $region3: #{cnn_forward.1} parent=0 // pred_check_branch
    %11 = sbr.rel (0) target = $region5
  $region4: #{cnn_forward.1} parent=0 // pred_region
    _
  $region5: #{cnn_forward.1} parent=0 // pred_fallthru
    _
  // Predicated region
  $region6: #{cnn_forward.1} parent=0 // pred_check
    _
  $region7: #{cnn_forward.1} parent=0 // pred_check_branch
    %13 = sbr.rel (0) target = $region9
  $region8: #{cnn_forward.1} parent=0 // pred_region
    _
  $region9: #{cnn_forward.1} parent=0 // pred_fallthru
    _
  // Predicated region
  $region10: #{cnn_forward.1} parent=0 // pred_check
    _
  $region11: #{cnn_forward.1} parent=0 // pred_check_branch
    %15 = sbr.rel (0) target = $region13
  $region12: #{cnn_forward.1} parent=0 // pred_region
    _
  $region13: #{cnn_forward.1} parent=0 // pred_fallthru
    _
  // Predicated region
  $region14: #{cnn_forward.1} parent=0 // pred_check
    _
  $region15: #{cnn_forward.1} parent=0 // pred_check_branch
    %17 = sbr.rel (0) target = $region17
  $region16: #{cnn_forward.1} parent=0 // pred_region
    _
  $region17: #{cnn_forward.1} parent=0 // pred_fallthru
    _
  // Predicated region
  $region18: #{cnn_forward.1} parent=0 // pred_check
    _
  $region19: #{cnn_forward.1} parent=0 // pred_check_branch
    %19 = sbr.rel (0) target = $region21
  $region20: #{cnn_forward.1} parent=0 // pred_region
    _
  $region21: #{cnn_forward.1} parent=0 // pred_fallthru
    _
  %v20 = vld [vmem:[%s0] sm:$0xff]
  %v21 = vld [vmem:[%s0 + $0x8] sm:$0xff]
  %v22 = vld [vmem:[%s0 + $0x10] sm:$0xff]
  %v23 = vld [vmem:[%s0 + $0x18] sm:$0xff]
  %v24 = vld [vmem:[%s0 + $0x20] sm:$0xff]
  %v25 = vld [vmem:[%s0 + $0x28] sm:$0xff]
  %v26 = vld [vmem:[%s0 + $0x30] sm:$0xff]
  %v27 = vld [vmem:[%s0 + $0x38] sm:$0xff]
  %v28 = vld [vmem:[%s0 + $0x40] sm:$0xff]
  %v29 = vld [vmem:[%s0 + $0x48] sm:$0xff]
  %v30 = vld [vmem:[%s0 + $0x50] sm:$0xff]
  %v31 = vld [vmem:[%s0 + $0x58] sm:$0xff]
  %v32 = vld [vmem:[%s0 + $0x60] sm:$0xff]
  %v33 = vld [vmem:[%s0 + $0x68] sm:$0xff]
  %v34 = vld [vmem:[%s0 + $0x70] sm:$0xff]
  %v35 = vld [vmem:[%s0 + $0x78] sm:$0xff]
  %v36 = vld [vmem:[%s0 + $0x80] sm:$0xff]
  %v37 = vld [vmem:[%s0 + $0x88] sm:$0xff]
  %v38 = vld [vmem:[%s0 + $0x90] sm:$0xff]
  %v39 = vld [vmem:[%s0 + $0x98] sm:$0xff]
  %v40 = vld [vmem:[%s0 + $0xa0] sm:$0xff]
  %v41 = vld [vmem:[%s0 + $0xa8] sm:$0xff]
  %v42 = vld [vmem:[%s0 + $0xb0] sm:$0xff]
  %v43 = vld [vmem:[%s0 + $0xb8] sm:$0xff]
  %v44 = vld [vmem:[%s0 + $0xc0] sm:$0xff]
  %v45 = vld [vmem:[%s0 + $0xc8] sm:$0xff]
  %v46 = vld [vmem:[%s0 + $0xd0] sm:$0xff]
  %v47 = vld [vmem:[%s0 + $0xd8] sm:$0xff]
  %v48 = vld [vmem:[%s0 + $0xe0] sm:$0xff]
  %v49 = vld [vmem:[%s0 + $0xe8] sm:$0xff]
  %v50 = vld [vmem:[%s0 + $0xf0] sm:$0xff]
  %v51 = vld [vmem:[%s0 + $0xf8] sm:$0xff]
  %v52 = vld [vmem:[%s0 + $0x100] sm:$0xff]
  %v53 = vld [vmem:[%s0 + $0x108] sm:$0xff]
  %v54 = vld [vmem:[%s0 + $0x110] sm:$0xff]
  %v55 = vld [vmem:[%s0 + $0x118] sm:$0xff]
  %v56 = vld [vmem:[%s0 + $0x120] sm:$0xff]
  %v57 = vld [vmem:[%s0 + $0x128] sm:$0xff]
  %v58 = vld [vmem:[%s0 + $0x130] sm:$0xff]
  %v59 = vld [vmem:[%s0 + $0x138] sm:$0xff]
  %v60 = vld [vmem:[%s0 + $0x140] sm:$0xff]
  %v61 = vld [vmem:[%s0 + $0x148] sm:$0xff]
  %v62 = vld [vmem:[%s1] sm:$0xff]
  %v63 = vld [vmem:[%s1 + $0x8] sm:$0xff]
  %v64 = vld [vmem:[%s1 + $0x10] sm:$0xff]
  %v65 = vld [vmem:[%s1 + $0x18] sm:$0xff]
  %v66 = vld [vmem:[%s1 + $0x20] sm:$0xff]
  %v67 = vld [vmem:[%s1 + $0x28] sm:$0xff]
  %v68 = vld [vmem:[%s1 + $0x30] sm:$0xff]
  %v69 = vld [vmem:[%s1 + $0x38] sm:$0xff]
  %vm70 = vcmask 523264
  %v72 = vsel %vm70, %v20, 0
  %v75 = vsel %vm70, %v21, 0
  %v78 = vsel %vm70, %v22, 0
  %v81 = vsel %vm70, %v23, 0
  %v84 = vsel %vm70, %v24, 0
  %v87 = vsel %vm70, %v25, 0
  %v90 = vsel %vm70, %v26, 0
  %v93 = vsel %vm70, %v27, 0
  %v96 = vsel %vm70, %v28, 0
  %v99 = vsel %vm70, %v29, 0
  %v102 = vsel %vm70, %v30, 0
  %v105 = vsel %vm70, %v31, 0
  %v108 = vsel %vm70, %v32, 0
  %v111 = vsel %vm70, %v33, 0
  %v114 = vsel %vm70, %v34, 0
  %v117 = vsel %vm70, %v35, 0
  %v120 = vsel %vm70, %v36, 0
  %v123 = vsel %vm70, %v37, 0
  %v126 = vsel %vm70, %v38, 0
  %v129 = vsel %vm70, %v39, 0
  %v132 = vsel %vm70, %v40, 0
  %v135 = vsel %vm70, %v41, 0
  %v138 = vsel %vm70, %v42, 0
  %v141 = vsel %vm70, %v43, 0
  %v144 = vsel %vm70, %v44, 0
  %v147 = vsel %vm70, %v45, 0
  %v150 = vsel %vm70, %v46, 0
  %v153 = vsel %vm70, %v47, 0
  %v156 = vsel %vm70, %v48, 0
  %v159 = vsel %vm70, %v49, 0
  %v162 = vsel %vm70, %v50, 0
  %v165 = vsel %vm70, %v51, 0
  %v168 = vsel %vm70, %v52, 0
  %v171 = vsel %vm70, %v53, 0
  %v174 = vsel %vm70, %v54, 0
  %v177 = vsel %vm70, %v55, 0
  %v180 = vsel %vm70, %v56, 0
  %v183 = vsel %vm70, %v57, 0
  %v186 = vsel %vm70, %v58, 0
  %v189 = vsel %vm70, %v59, 0
  %v192 = vsel %vm70, %v60, 0
  %v195 = vsel %vm70, %v61, 0
  %197 = vmatprep.subr.mxu0 0.0
  %198 = vmatpush1.msra.mxu0 %v62
  %199 = vmatprep.subr.mxu0 0.0
  %200 = vmatpush1.msra.mxu0 %v63
  %201 = vmatprep.subr.mxu0 0.0
  %202 = vmatpush1.msra.mxu0 %v64
  %203 = vmatprep.subr.mxu0 0.0
  %204 = vmatpush1.msra.mxu0 %v65
  %205 = vmatprep.subr.mxu0 0.0
  %206 = vmatpush1.msra.mxu0 %v66
  %207 = vmatprep.subr.mxu0 0.0
  %208 = vmatpush1.msra.mxu0 %v67
  %209 = vmatprep.subr.mxu0 0.0
  %210 = vmatpush1.msra.mxu0 %v68
  %211 = vmatprep.subr.mxu0 0.0
  %212 = vmatpush1.msra.mxu0 %v69
  %213 = vmatprep.subr.mxu0 0.0
  %214 = vmatpush1.msra.mxu0 0.0
  %215 = vmatprep.subr.mxu0 0.0
  %216 = vmatpush1.msra.mxu0 0.0
  %217 = vmatprep.subr.mxu0 0.0
  %218 = vmatpush1.msra.mxu0 0.0
  %219 = vmatprep.subr.mxu0 0.0
  %220 = vmatpush1.msra.mxu0 0.0
  %221 = vmatprep.subr.mxu0 0.0
  %222 = vmatpush1.msra.mxu0 0.0
  %223 = vmatprep.subr.mxu0 0.0
  %224 = vmatpush1.msra.mxu0 0.0
  %225 = vmatprep.subr.mxu0 0.0
  %226 = vmatpush1.msra.mxu0 0.0
  %227 = vmatprep.subr.mxu0 0.0
  %228 = vmatpush1.msra.mxu0 0.0
  %229 = vmatprep.subr.mxu0 0.0
  %230 = vmatpush1.msra.mxu0 0.0
  %231 = vmatprep.subr.mxu0 0.0
  %232 = vmatpush1.msra.mxu0 0.0
  %233 = vmatprep.subr.mxu0 0.0
  %234 = vmatpush1.msra.mxu0 0.0
  %235 = vmatprep.subr.mxu0 0.0
  %236 = vmatpush1.msra.mxu0 0.0
  %237 = vmatprep.subr.mxu0 0.0
  %238 = vmatpush1.msra.mxu0 0.0
  %239 = vmatprep.subr.mxu0 0.0
  %240 = vmatpush1.msra.mxu0 0.0
  %241 = vmatprep.subr.mxu0 0.0
  %242 = vmatpush1.msra.mxu0 0.0
  %243 = vmatprep.subr.mxu0 0.0
  %244 = vmatpush1.msra.mxu0 0.0
  %245 = vmatprep.subr.mxu0 0.0
  %246 = vmatpush1.msra.mxu0 0.0
  %247 = vmatprep.subr.mxu0 0.0
  %248 = vmatpush1.msra.mxu0 0.0
  %249 = vmatprep.subr.mxu0 0.0
  %250 = vmatpush1.msra.mxu0 0.0
  %251 = vmatprep.subr.mxu0 0.0
  %252 = vmatpush1.msra.mxu0 0.0
  %253 = vmatprep.subr.mxu0 0.0
  %254 = vmatpush1.msra.mxu0 0.0
  %255 = vmatprep.subr.mxu0 0.0
  %256 = vmatpush1.msra.mxu0 0.0
  %257 = vmatprep.subr.mxu0 0.0
  %258 = vmatpush1.msra.mxu0 0.0
  %259 = vmatprep.subr.mxu0 0.0
  %260 = vmatpush1.msra.mxu0 0.0
  %261 = vmatprep.mubr.f32.mxu0 0.0
  %262 = vmatmul.mubr.f32.gmra.mrb[0].mxu0 %v72
  %v263 = vpop.f32.mrb[0].mxu0
  %v264 = vadd.f32 0.0, %v263
  %v265 = vpop.f32.mrb[0].mxu0
  %266 = vmatprep.mubr.f32.mxu0 0.0
  %267 = vmatmul.mubr.f32.gmra.mrb[0].mxu0 %v75
  %v268 = vpop.f32.mrb[0].mxu0
  %v269 = vadd.f32 0.0, %v268
  %v270 = vpop.f32.mrb[0].mxu0
  %271 = vmatprep.mubr.f32.mxu0 0.0
  %272 = vmatmul.mubr.f32.gmra.mrb[0].mxu0 %v78
  %v273 = vpop.f32.mrb[0].mxu0
  %v274 = vadd.f32 0.0, %v273
  %v275 = vpop.f32.mrb[0].mxu0
  %276 = vmatprep.mubr.f32.mxu0 0.0
  %277 = vmatmul.mubr.f32.gmra.mrb[0].mxu0 %v81
  %v278 = vpop.f32.mrb[0].mxu0
  %v279 = vadd.f32 0.0, %v278
  %v280 = vpop.f32.mrb[0].mxu0
  %281 = vmatprep.mubr.f32.mxu0 0.0
  %282 = vmatmul.mubr.f32.gmra.mrb[0].mxu0 %v84
  %v283 = vpop.f32.mrb[0].mxu0
  %v284 = vadd.f32 0.0, %v283
  %v285 = vpop.f32.mrb[0].mxu0
  %286 = vmatprep.mubr.f32.mxu0 0.0
  %287 = vmatmul.mubr.f32.gmra.mrb[0].mxu0 %v87
  %v288 = vpop.f32.mrb[0].mxu0
  %v289 = vadd.f32 0.0, %v288
  %v290 = vpop.f32.mrb[0].mxu0
  %291 = vmatprep.mubr.f32.mxu0 0.0
  %292 = vmatmul.mubr.f32.gmra.mrb[0].mxu0 %v90
  %v293 = vpop.f32.mrb[0].mxu0
  %v294 = vadd.f32 0.0, %v293
  %v295 = vpop.f32.mrb[0].mxu0
  %296 = vmatprep.mubr.f32.mxu0 0.0
  %297 = vmatmul.mubr.f32.gmra.mrb[0].mxu0 %v93
  %v298 = vpop.f32.mrb[0].mxu0
  %v299 = vadd.f32 0.0, %v298
  %v300 = vpop.f32.mrb[0].mxu0
  %301 = vmatprep.mubr.f32.mxu0 0.0
  %302 = vmatmul.mubr.f32.gmra.mrb[0].mxu0 %v96
  %v303 = vpop.f32.mrb[0].mxu0
  %v304 = vadd.f32 0.0, %v303
  %v305 = vpop.f32.mrb[0].mxu0
  %306 = vmatprep.mubr.f32.mxu0 0.0
  %307 = vmatmul.mubr.f32.gmra.mrb[0].mxu0 %v99
  %v308 = vpop.f32.mrb[0].mxu0
  %v309 = vadd.f32 0.0, %v308
  %v310 = vpop.f32.mrb[0].mxu0
  %311 = vmatprep.mubr.f32.mxu0 0.0
  %312 = vmatmul.mubr.f32.gmra.mrb[0].mxu0 %v102
  %v313 = vpop.f32.mrb[0].mxu0
  %v314 = vadd.f32 0.0, %v313
  %v315 = vpop.f32.mrb[0].mxu0
  %316 = vmatprep.mubr.f32.mxu0 0.0
  %317 = vmatmul.mubr.f32.gmra.mrb[0].mxu0 %v105
  %v318 = vpop.f32.mrb[0].mxu0
  %v319 = vadd.f32 0.0, %v318
  %v320 = vpop.f32.mrb[0].mxu0
  %321 = vmatprep.mubr.f32.mxu0 0.0
  %322 = vmatmul.mubr.f32.gmra.mrb[0].mxu0 %v108
  %v323 = vpop.f32.mrb[0].mxu0
  %v324 = vadd.f32 0.0, %v323
  %v325 = vpop.f32.mrb[0].mxu0
  %326 = vmatprep.mubr.f32.mxu0 0.0
  %327 = vmatmul.mubr.f32.gmra.mrb[0].mxu0 %v111
  %v328 = vpop.f32.mrb[0].mxu0
  %v329 = vadd.f32 0.0, %v328
  %v330 = vpop.f32.mrb[0].mxu0
  %331 = vmatprep.mubr.f32.mxu0 0.0
  %332 = vmatmul.mubr.f32.gmra.mrb[0].mxu0 %v114
  %v333 = vpop.f32.mrb[0].mxu0
  %v334 = vadd.f32 0.0, %v333
  %v335 = vpop.f32.mrb[0].mxu0
  %336 = vmatprep.mubr.f32.mxu0 0.0
  %337 = vmatmul.mubr.f32.gmra.mrb[0].mxu0 %v117
  %v338 = vpop.f32.mrb[0].mxu0
  %v339 = vadd.f32 0.0, %v338
  %v340 = vpop.f32.mrb[0].mxu0
  %341 = vmatprep.mubr.f32.mxu0 0.0
  %342 = vmatmul.mubr.f32.gmra.mrb[0].mxu0 %v120
  %v343 = vpop.f32.mrb[0].mxu0
  %v344 = vadd.f32 0.0, %v343
  %v345 = vpop.f32.mrb[0].mxu0
  %346 = vmatprep.mubr.f32.mxu0 0.0
  %347 = vmatmul.mubr.f32.gmra.mrb[0].mxu0 %v123
  %v348 = vpop.f32.mrb[0].mxu0
  %v349 = vadd.f32 0.0, %v348
  %v350 = vpop.f32.mrb[0].mxu0
  %351 = vmatprep.mubr.f32.mxu0 0.0
  %352 = vmatmul.mubr.f32.gmra.mrb[0].mxu0 %v126
  %v353 = vpop.f32.mrb[0].mxu0
  %v354 = vadd.f32 0.0, %v353
  %v355 = vpop.f32.mrb[0].mxu0
  %356 = vmatprep.mubr.f32.mxu0 0.0
  %357 = vmatmul.mubr.f32.gmra.mrb[0].mxu0 %v129
  %v358 = vpop.f32.mrb[0].mxu0
  %v359 = vadd.f32 0.0, %v358
  %v360 = vpop.f32.mrb[0].mxu0
  %361 = vmatprep.mubr.f32.mxu0 0.0
  %362 = vmatmul.mubr.f32.gmra.mrb[0].mxu0 %v132
  %v363 = vpop.f32.mrb[0].mxu0
  %v364 = vadd.f32 0.0, %v363
  %v365 = vpop.f32.mrb[0].mxu0
  %366 = vmatprep.mubr.f32.mxu0 0.0
  %367 = vmatmul.mubr.f32.gmra.mrb[0].mxu0 %v135
  %v368 = vpop.f32.mrb[0].mxu0
  %v369 = vadd.f32 0.0, %v368
  %v370 = vpop.f32.mrb[0].mxu0
  %371 = vmatprep.mubr.f32.mxu0 0.0
  %372 = vmatmul.mubr.f32.gmra.mrb[0].mxu0 %v138
  %v373 = vpop.f32.mrb[0].mxu0
  %v374 = vadd.f32 0.0, %v373
  %v375 = vpop.f32.mrb[0].mxu0
  %376 = vmatprep.mubr.f32.mxu0 0.0
  %377 = vmatmul.mubr.f32.gmra.mrb[0].mxu0 %v141
  %v378 = vpop.f32.mrb[0].mxu0
  %v379 = vadd.f32 0.0, %v378
  %v380 = vpop.f32.mrb[0].mxu0
  %381 = vmatprep.mubr.f32.mxu0 0.0
  %382 = vmatmul.mubr.f32.gmra.mrb[0].mxu0 %v144
  %v383 = vpop.f32.mrb[0].mxu0
  %v384 = vadd.f32 0.0, %v383
  %v385 = vpop.f32.mrb[0].mxu0
  %386 = vmatprep.mubr.f32.mxu0 0.0
  %387 = vmatmul.mubr.f32.gmra.mrb[0].mxu0 %v147
  %v388 = vpop.f32.mrb[0].mxu0
  %v389 = vadd.f32 0.0, %v388
  %v390 = vpop.f32.mrb[0].mxu0
  %391 = vmatprep.mubr.f32.mxu0 0.0
  %392 = vmatmul.mubr.f32.gmra.mrb[0].mxu0 %v150
  %v393 = vpop.f32.mrb[0].mxu0
  %v394 = vadd.f32 0.0, %v393
  %v395 = vpop.f32.mrb[0].mxu0
  %396 = vmatprep.mubr.f32.mxu0 0.0
  %397 = vmatmul.mubr.f32.gmra.mrb[0].mxu0 %v153
  %v398 = vpop.f32.mrb[0].mxu0
  %v399 = vadd.f32 0.0, %v398
  %v400 = vpop.f32.mrb[0].mxu0
  %401 = vmatprep.mubr.f32.mxu0 0.0
  %402 = vmatmul.mubr.f32.gmra.mrb[0].mxu0 %v156
  %v403 = vpop.f32.mrb[0].mxu0
  %v404 = vadd.f32 0.0, %v403
  %v405 = vpop.f32.mrb[0].mxu0
  %406 = vmatprep.mubr.f32.mxu0 0.0
  %407 = vmatmul.mubr.f32.gmra.mrb[0].mxu0 %v159
  %v408 = vpop.f32.mrb[0].mxu0
  %v409 = vadd.f32 0.0, %v408
  %v410 = vpop.f32.mrb[0].mxu0
  %411 = vmatprep.mubr.f32.mxu0 0.0
  %412 = vmatmul.mubr.f32.gmra.mrb[0].mxu0 %v162
  %v413 = vpop.f32.mrb[0].mxu0
  %v414 = vadd.f32 0.0, %v413
  %v415 = vpop.f32.mrb[0].mxu0
  %416 = vmatprep.mubr.f32.mxu0 0.0
  %417 = vmatmul.mubr.f32.gmra.mrb[0].mxu0 %v165
  %v418 = vpop.f32.mrb[0].mxu0
  %v419 = vadd.f32 0.0, %v418
  %v420 = vpop.f32.mrb[0].mxu0
  %421 = vmatprep.mubr.f32.mxu0 0.0
  %422 = vmatmul.mubr.f32.gmra.mrb[0].mxu0 %v168
  %v423 = vpop.f32.mrb[0].mxu0
  %v424 = vadd.f32 0.0, %v423
  %v425 = vpop.f32.mrb[0].mxu0
  %426 = vmatprep.mubr.f32.mxu0 0.0
  %427 = vmatmul.mubr.f32.gmra.mrb[0].mxu0 %v171
  %v428 = vpop.f32.mrb[0].mxu0
  %v429 = vadd.f32 0.0, %v428
  %v430 = vpop.f32.mrb[0].mxu0
  %431 = vmatprep.mubr.f32.mxu0 0.0
  %432 = vmatmul.mubr.f32.gmra.mrb[0].mxu0 %v174
  %v433 = vpop.f32.mrb[0].mxu0
  %v434 = vadd.f32 0.0, %v433
  %v435 = vpop.f32.mrb[0].mxu0
  %436 = vmatprep.mubr.f32.mxu0 0.0
  %437 = vmatmul.mubr.f32.gmra.mrb[0].mxu0 %v177
  %v438 = vpop.f32.mrb[0].mxu0
  %v439 = vadd.f32 0.0, %v438
  %v440 = vpop.f32.mrb[0].mxu0
  %441 = vmatprep.mubr.f32.mxu0 0.0
  %442 = vmatmul.mubr.f32.gmra.mrb[0].mxu0 %v180
  %v443 = vpop.f32.mrb[0].mxu0
  %v444 = vadd.f32 0.0, %v443
  %v445 = vpop.f32.mrb[0].mxu0
  %446 = vmatprep.mubr.f32.mxu0 0.0
  %447 = vmatmul.mubr.f32.gmra.mrb[0].mxu0 %v183
  %v448 = vpop.f32.mrb[0].mxu0
  %v449 = vadd.f32 0.0, %v448
  %v450 = vpop.f32.mrb[0].mxu0
  %451 = vmatprep.mubr.f32.mxu0 0.0
  %452 = vmatmul.mubr.f32.gmra.mrb[0].mxu0 %v186
  %v453 = vpop.f32.mrb[0].mxu0
  %v454 = vadd.f32 0.0, %v453
  %v455 = vpop.f32.mrb[0].mxu0
  %456 = vmatprep.mubr.f32.mxu0 0.0
  %457 = vmatmul.mubr.f32.gmra.mrb[0].mxu0 %v189
  %v458 = vpop.f32.mrb[0].mxu0
  %v459 = vadd.f32 0.0, %v458
  %v460 = vpop.f32.mrb[0].mxu0
  %461 = vmatprep.mubr.f32.mxu0 0.0
  %462 = vmatmul.mubr.f32.gmra.mrb[0].mxu0 %v192
  %v463 = vpop.f32.mrb[0].mxu0
  %v464 = vadd.f32 0.0, %v463
  %v465 = vpop.f32.mrb[0].mxu0
  %466 = vmatprep.mubr.f32.mxu0 0.0
  %467 = vmatmul.mubr.f32.gmra.mrb[0].mxu0 %v195
  %v468 = vpop.f32.mrb[0].mxu0
  %v469 = vadd.f32 0.0, %v468
  %v470 = vpop.f32.mrb[0].mxu0
  %471 = vdwg.mxu0
  %514 = vrot.lane.b32.xlu0 %v264, 64
  %v515 = vpop.permute.xlu0 %514
  %516 = vrot.lane.b32.xlu0 %v269, 64
  %v517 = vpop.permute.xlu0 %516
  %518 = vrot.lane.b32.xlu0 %v274, 64
  %v519 = vpop.permute.xlu0 %518
  %520 = vrot.lane.b32.xlu0 %v279, 64
  %v521 = vpop.permute.xlu0 %520
  %522 = vrot.lane.b32.xlu0 %v284, 64
  %v523 = vpop.permute.xlu0 %522
  %524 = vrot.lane.b32.xlu0 %v289, 64
  %v525 = vpop.permute.xlu0 %524
  %526 = vrot.lane.b32.xlu0 %v294, 64
  %v527 = vpop.permute.xlu0 %526
  %528 = vrot.lane.b32.xlu0 %v299, 64
  %v529 = vpop.permute.xlu0 %528
  %530 = vrot.lane.b32.xlu0 %v304, 64
  %v531 = vpop.permute.xlu0 %530
  %532 = vrot.lane.b32.xlu0 %v309, 64
  %v533 = vpop.permute.xlu0 %532
  %534 = vrot.lane.b32.xlu0 %v314, 64
  %v535 = vpop.permute.xlu0 %534
  %536 = vrot.lane.b32.xlu0 %v319, 64
  %v537 = vpop.permute.xlu0 %536
  %538 = vrot.lane.b32.xlu0 %v324, 64
  %v539 = vpop.permute.xlu0 %538
  %540 = vrot.lane.b32.xlu0 %v329, 64
  %v541 = vpop.permute.xlu0 %540
  %542 = vrot.lane.b32.xlu0 %v334, 64
  %v543 = vpop.permute.xlu0 %542
  %544 = vrot.lane.b32.xlu0 %v339, 64
  %v545 = vpop.permute.xlu0 %544
  %546 = vrot.lane.b32.xlu0 %v344, 64
  %v547 = vpop.permute.xlu0 %546
  %548 = vrot.lane.b32.xlu0 %v349, 64
  %v549 = vpop.permute.xlu0 %548
  %550 = vrot.lane.b32.xlu0 %v354, 64
  %v551 = vpop.permute.xlu0 %550
  %552 = vrot.lane.b32.xlu0 %v359, 64
  %v553 = vpop.permute.xlu0 %552
  %554 = vrot.lane.b32.xlu0 %v364, 64
  %v555 = vpop.permute.xlu0 %554
  %556 = vrot.lane.b32.xlu0 %v369, 64
  %v557 = vpop.permute.xlu0 %556
  %558 = vrot.lane.b32.xlu0 %v374, 64
  %v559 = vpop.permute.xlu0 %558
  %560 = vrot.lane.b32.xlu0 %v379, 64
  %v561 = vpop.permute.xlu0 %560
  %562 = vrot.lane.b32.xlu0 %v384, 64
  %v563 = vpop.permute.xlu0 %562
  %564 = vrot.lane.b32.xlu0 %v389, 64
  %v565 = vpop.permute.xlu0 %564
  %566 = vrot.lane.b32.xlu0 %v394, 64
  %v567 = vpop.permute.xlu0 %566
  %568 = vrot.lane.b32.xlu0 %v399, 64
  %v569 = vpop.permute.xlu0 %568
  %570 = vrot.lane.b32.xlu0 %v404, 64
  %v571 = vpop.permute.xlu0 %570
  %572 = vrot.lane.b32.xlu0 %v409, 64
  %v573 = vpop.permute.xlu0 %572
  %574 = vrot.lane.b32.xlu0 %v414, 64
  %v575 = vpop.permute.xlu0 %574
  %576 = vrot.lane.b32.xlu0 %v419, 64
  %v577 = vpop.permute.xlu0 %576
  %578 = vrot.lane.b32.xlu0 %v424, 64
  %v579 = vpop.permute.xlu0 %578
  %580 = vrot.lane.b32.xlu0 %v429, 64
  %v581 = vpop.permute.xlu0 %580
  %582 = vrot.lane.b32.xlu0 %v434, 64
  %v583 = vpop.permute.xlu0 %582
  %584 = vrot.lane.b32.xlu0 %v439, 64
  %v585 = vpop.permute.xlu0 %584
  %586 = vrot.lane.b32.xlu0 %v444, 64
  %v587 = vpop.permute.xlu0 %586
  %588 = vrot.lane.b32.xlu0 %v449, 64
  %v589 = vpop.permute.xlu0 %588
  %590 = vrot.lane.b32.xlu0 %v454, 64
  %v591 = vpop.permute.xlu0 %590
  %592 = vrot.lane.b32.xlu0 %v459, 64
  %v593 = vpop.permute.xlu0 %592
  %594 = vrot.lane.b32.xlu0 %v464, 64
  %v595 = vpop.permute.xlu0 %594
  %596 = vrot.lane.b32.xlu0 %v469, 64
  %v597 = vpop.permute.xlu0 %596
  %v640 = vmax.f32 %v264, %v515
  %v641 = vmax.f32 %v269, %v517
  %v642 = vmax.f32 %v274, %v519
  %v643 = vmax.f32 %v279, %v521
  %v644 = vmax.f32 %v284, %v523
  %v645 = vmax.f32 %v289, %v525
  %v646 = vmax.f32 %v294, %v527
  %v647 = vmax.f32 %v299, %v529
  %v648 = vmax.f32 %v304, %v531
  %v649 = vmax.f32 %v309, %v533
  %v650 = vmax.f32 %v314, %v535
  %v651 = vmax.f32 %v319, %v537
  %v652 = vmax.f32 %v324, %v539
  %v653 = vmax.f32 %v329, %v541
  %v654 = vmax.f32 %v334, %v543
  %v655 = vmax.f32 %v339, %v545
  %v656 = vmax.f32 %v344, %v547
  %v657 = vmax.f32 %v349, %v549
  %v658 = vmax.f32 %v354, %v551
  %v659 = vmax.f32 %v359, %v553
  %v660 = vmax.f32 %v364, %v555
  %v661 = vmax.f32 %v369, %v557
  %v662 = vmax.f32 %v374, %v559
  %v663 = vmax.f32 %v379, %v561
  %v664 = vmax.f32 %v384, %v563
  %v665 = vmax.f32 %v389, %v565
  %v666 = vmax.f32 %v394, %v567
  %v667 = vmax.f32 %v399, %v569
  %v668 = vmax.f32 %v404, %v571
  %v669 = vmax.f32 %v409, %v573
  %v670 = vmax.f32 %v414, %v575
  %v671 = vmax.f32 %v419, %v577
  %v672 = vmax.f32 %v424, %v579
  %v673 = vmax.f32 %v429, %v581
  %v674 = vmax.f32 %v434, %v583
  %v675 = vmax.f32 %v439, %v585
  %v676 = vmax.f32 %v444, %v587
  %v677 = vmax.f32 %v449, %v589
  %v678 = vmax.f32 %v454, %v591
  %v679 = vmax.f32 %v459, %v593
  %v680 = vmax.f32 %v464, %v595
  %v681 = vmax.f32 %v469, %v597
  %724 = vrot.lane.b32.xlu0 %v640, 96
  %v725 = vpop.permute.xlu0 %724
  %726 = vrot.lane.b32.xlu0 %v641, 96
  %v727 = vpop.permute.xlu0 %726
  %728 = vrot.lane.b32.xlu0 %v642, 96
  %v729 = vpop.permute.xlu0 %728
  %730 = vrot.lane.b32.xlu0 %v643, 96
  %v731 = vpop.permute.xlu0 %730
  %732 = vrot.lane.b32.xlu0 %v644, 96
  %v733 = vpop.permute.xlu0 %732
  %734 = vrot.lane.b32.xlu0 %v645, 96
  %v735 = vpop.permute.xlu0 %734
  %736 = vrot.lane.b32.xlu0 %v646, 96
  %v737 = vpop.permute.xlu0 %736
  %738 = vrot.lane.b32.xlu0 %v647, 96
  %v739 = vpop.permute.xlu0 %738
  %740 = vrot.lane.b32.xlu0 %v648, 96
  %v741 = vpop.permute.xlu0 %740
  %742 = vrot.lane.b32.xlu0 %v649, 96
  %v743 = vpop.permute.xlu0 %742
  %744 = vrot.lane.b32.xlu0 %v650, 96
  %v745 = vpop.permute.xlu0 %744
  %746 = vrot.lane.b32.xlu0 %v651, 96
  %v747 = vpop.permute.xlu0 %746
  %748 = vrot.lane.b32.xlu0 %v652, 96
  %v749 = vpop.permute.xlu0 %748
  %750 = vrot.lane.b32.xlu0 %v653, 96
  %v751 = vpop.permute.xlu0 %750
  %752 = vrot.lane.b32.xlu0 %v654, 96
  %v753 = vpop.permute.xlu0 %752
  %754 = vrot.lane.b32.xlu0 %v655, 96
  %v755 = vpop.permute.xlu0 %754
  %756 = vrot.lane.b32.xlu0 %v656, 96
  %v757 = vpop.permute.xlu0 %756
  %758 = vrot.lane.b32.xlu0 %v657, 96
  %v759 = vpop.permute.xlu0 %758
  %760 = vrot.lane.b32.xlu0 %v658, 96
  %v761 = vpop.permute.xlu0 %760
  %762 = vrot.lane.b32.xlu0 %v659, 96
  %v763 = vpop.permute.xlu0 %762
  %764 = vrot.lane.b32.xlu0 %v660, 96
  %v765 = vpop.permute.xlu0 %764
  %766 = vrot.lane.b32.xlu0 %v661, 96
  %v767 = vpop.permute.xlu0 %766
  %768 = vrot.lane.b32.xlu0 %v662, 96
  %v769 = vpop.permute.xlu0 %768
  %770 = vrot.lane.b32.xlu0 %v663, 96
  %v771 = vpop.permute.xlu0 %770
  %772 = vrot.lane.b32.xlu0 %v664, 96
  %v773 = vpop.permute.xlu0 %772
  %774 = vrot.lane.b32.xlu0 %v665, 96
  %v775 = vpop.permute.xlu0 %774
  %776 = vrot.lane.b32.xlu0 %v666, 96
  %v777 = vpop.permute.xlu0 %776
  %778 = vrot.lane.b32.xlu0 %v667, 96
  %v779 = vpop.permute.xlu0 %778
  %780 = vrot.lane.b32.xlu0 %v668, 96
  %v781 = vpop.permute.xlu0 %780
  %782 = vrot.lane.b32.xlu0 %v669, 96
  %v783 = vpop.permute.xlu0 %782
  %784 = vrot.lane.b32.xlu0 %v670, 96
  %v785 = vpop.permute.xlu0 %784
  %786 = vrot.lane.b32.xlu0 %v671, 96
  %v787 = vpop.permute.xlu0 %786
  %788 = vrot.lane.b32.xlu0 %v672, 96
  %v789 = vpop.permute.xlu0 %788
  %790 = vrot.lane.b32.xlu0 %v673, 96
  %v791 = vpop.permute.xlu0 %790
  %792 = vrot.lane.b32.xlu0 %v674, 96
  %v793 = vpop.permute.xlu0 %792
  %794 = vrot.lane.b32.xlu0 %v675, 96
  %v795 = vpop.permute.xlu0 %794
  %796 = vrot.lane.b32.xlu0 %v676, 96
  %v797 = vpop.permute.xlu0 %796
  %798 = vrot.lane.b32.xlu0 %v677, 96
  %v799 = vpop.permute.xlu0 %798
  %800 = vrot.lane.b32.xlu0 %v678, 96
  %v801 = vpop.permute.xlu0 %800
  %802 = vrot.lane.b32.xlu0 %v679, 96
  %v803 = vpop.permute.xlu0 %802
  %804 = vrot.lane.b32.xlu0 %v680, 96
  %v805 = vpop.permute.xlu0 %804
  %806 = vrot.lane.b32.xlu0 %v681, 96
  %v807 = vpop.permute.xlu0 %806
  %v850 = vmax.f32 %v640, %v725
  %v851 = vmax.f32 %v641, %v727
  %v852 = vmax.f32 %v642, %v729
  %v853 = vmax.f32 %v643, %v731
  %v854 = vmax.f32 %v644, %v733
  %v855 = vmax.f32 %v645, %v735
  %v856 = vmax.f32 %v646, %v737
  %v857 = vmax.f32 %v647, %v739
  %v858 = vmax.f32 %v648, %v741
  %v859 = vmax.f32 %v649, %v743
  %v860 = vmax.f32 %v650, %v745
  %v861 = vmax.f32 %v651, %v747
  %v862 = vmax.f32 %v652, %v749
  %v863 = vmax.f32 %v653, %v751
  %v864 = vmax.f32 %v654, %v753
  %v865 = vmax.f32 %v655, %v755
  %v866 = vmax.f32 %v656, %v757
  %v867 = vmax.f32 %v657, %v759
  %v868 = vmax.f32 %v658, %v761
  %v869 = vmax.f32 %v659, %v763
  %v870 = vmax.f32 %v660, %v765
  %v871 = vmax.f32 %v661, %v767
  %v872 = vmax.f32 %v662, %v769
  %v873 = vmax.f32 %v663, %v771
  %v874 = vmax.f32 %v664, %v773
  %v875 = vmax.f32 %v665, %v775
  %v876 = vmax.f32 %v666, %v777
  %v877 = vmax.f32 %v667, %v779
  %v878 = vmax.f32 %v668, %v781
  %v879 = vmax.f32 %v669, %v783
  %v880 = vmax.f32 %v670, %v785
  %v881 = vmax.f32 %v671, %v787
  %v882 = vmax.f32 %v672, %v789
  %v883 = vmax.f32 %v673, %v791
  %v884 = vmax.f32 %v674, %v793
  %v885 = vmax.f32 %v675, %v795
  %v886 = vmax.f32 %v676, %v797
  %v887 = vmax.f32 %v677, %v799
  %v888 = vmax.f32 %v678, %v801
  %v889 = vmax.f32 %v679, %v803
  %v890 = vmax.f32 %v680, %v805
  %v891 = vmax.f32 %v681, %v807
  %v892 = vld [vmem:[%s2] sm:$0x1]
  %v894 = vlaneseq
  %v895 = vshrl.u32 %v894, 7
  %v896 = vsub.s32 0, %v895
  %v897 = vrot.slane %v892, %v896
  %v899 = vadd.f32 %v850, %v897
  %v900 = vadd.f32 %v851, %v897
  %v901 = vadd.f32 %v852, %v897
  %v902 = vadd.f32 %v853, %v897
  %v903 = vadd.f32 %v854, %v897
  %v904 = vadd.f32 %v855, %v897
  %v905 = vadd.f32 %v856, %v897
  %v906 = vadd.f32 %v857, %v897
  %v907 = vadd.f32 %v858, %v897
  %v908 = vadd.f32 %v859, %v897
  %v909 = vadd.f32 %v860, %v897
  %v910 = vadd.f32 %v861, %v897
  %v911 = vadd.f32 %v862, %v897
  %v912 = vadd.f32 %v863, %v897
  %v913 = vadd.f32 %v864, %v897
  %v914 = vadd.f32 %v865, %v897
  %v915 = vadd.f32 %v866, %v897
  %v916 = vadd.f32 %v867, %v897
  %v917 = vadd.f32 %v868, %v897
  %v918 = vadd.f32 %v869, %v897
  %v919 = vadd.f32 %v870, %v897
  %v920 = vadd.f32 %v871, %v897
  %v921 = vadd.f32 %v872, %v897
  %v922 = vadd.f32 %v873, %v897
  %v923 = vadd.f32 %v874, %v897
  %v924 = vadd.f32 %v875, %v897
  %v925 = vadd.f32 %v876, %v897
  %v926 = vadd.f32 %v877, %v897
  %v927 = vadd.f32 %v878, %v897
  %v928 = vadd.f32 %v879, %v897
  %v929 = vadd.f32 %v880, %v897
  %v930 = vadd.f32 %v881, %v897
  %v931 = vadd.f32 %v882, %v897
  %v932 = vadd.f32 %v883, %v897
  %v933 = vadd.f32 %v884, %v897
  %v934 = vadd.f32 %v885, %v897
  %v935 = vadd.f32 %v886, %v897
  %v936 = vadd.f32 %v887, %v897
  %v937 = vadd.f32 %v888, %v897
  %v938 = vadd.f32 %v889, %v897
  %v939 = vadd.f32 %v890, %v897
  %v940 = vadd.f32 %v891, %v897
  %v941 = vmax.f32 %v899, 0.0
  %v942 = vmax.f32 %v900, 0.0
  %v943 = vmax.f32 %v901, 0.0
  %v944 = vmax.f32 %v902, 0.0
  %v945 = vmax.f32 %v903, 0.0
  %v946 = vmax.f32 %v904, 0.0
  %v947 = vmax.f32 %v905, 0.0
  %v948 = vmax.f32 %v906, 0.0
  %v949 = vmax.f32 %v907, 0.0
  %v950 = vmax.f32 %v908, 0.0
  %v951 = vmax.f32 %v909, 0.0
  %v952 = vmax.f32 %v910, 0.0
  %v953 = vmax.f32 %v911, 0.0
  %v954 = vmax.f32 %v912, 0.0
  %v955 = vmax.f32 %v913, 0.0
  %v956 = vmax.f32 %v914, 0.0
  %v957 = vmax.f32 %v915, 0.0
  %v958 = vmax.f32 %v916, 0.0
  %v959 = vmax.f32 %v917, 0.0
  %v960 = vmax.f32 %v918, 0.0
  %v961 = vmax.f32 %v919, 0.0
  %v962 = vmax.f32 %v920, 0.0
  %v963 = vmax.f32 %v921, 0.0
  %v964 = vmax.f32 %v922, 0.0
  %v965 = vmax.f32 %v923, 0.0
  %v966 = vmax.f32 %v924, 0.0
  %v967 = vmax.f32 %v925, 0.0
  %v968 = vmax.f32 %v926, 0.0
  %v969 = vmax.f32 %v927, 0.0
  %v970 = vmax.f32 %v928, 0.0
  %v971 = vmax.f32 %v929, 0.0
  %v972 = vmax.f32 %v930, 0.0
  %v973 = vmax.f32 %v931, 0.0
  %v974 = vmax.f32 %v932, 0.0
  %v975 = vmax.f32 %v933, 0.0
  %v976 = vmax.f32 %v934, 0.0
  %v977 = vmax.f32 %v935, 0.0
  %v978 = vmax.f32 %v936, 0.0
  %v979 = vmax.f32 %v937, 0.0
  %v980 = vmax.f32 %v938, 0.0
  %v981 = vmax.f32 %v939, 0.0
  %v982 = vmax.f32 %v940, 0.0
  %vm983 = vcmask 261120
  %984 = vst.msk [vmem:[#allocation2] sm:$0xff] %vm983, %v941
  %985 = vst.msk [vmem:[#allocation2 + $0x8] sm:$0xff] %vm983, %v942
  %986 = vst.msk [vmem:[#allocation2 + $0x10] sm:$0xff] %vm983, %v943
  %987 = vst.msk [vmem:[#allocation2 + $0x18] sm:$0xff] %vm983, %v944
  %988 = vst.msk [vmem:[#allocation2 + $0x20] sm:$0xff] %vm983, %v945
  %989 = vst.msk [vmem:[#allocation2 + $0x28] sm:$0xff] %vm983, %v946
  %990 = vst.msk [vmem:[#allocation2 + $0x30] sm:$0xff] %vm983, %v947
  %991 = vst.msk [vmem:[#allocation2 + $0x38] sm:$0xff] %vm983, %v948
  %992 = vst.msk [vmem:[#allocation2 + $0x40] sm:$0xff] %vm983, %v949
  %993 = vst.msk [vmem:[#allocation2 + $0x48] sm:$0xff] %vm983, %v950
  %994 = vst.msk [vmem:[#allocation2 + $0x50] sm:$0xff] %vm983, %v951
  %995 = vst.msk [vmem:[#allocation2 + $0x58] sm:$0xff] %vm983, %v952
  %996 = vst.msk [vmem:[#allocation2 + $0x60] sm:$0xff] %vm983, %v953
  %997 = vst.msk [vmem:[#allocation2 + $0x68] sm:$0xff] %vm983, %v954
  %998 = vst.msk [vmem:[#allocation2 + $0x70] sm:$0xff] %vm983, %v955
  %999 = vst.msk [vmem:[#allocation2 + $0x78] sm:$0xff] %vm983, %v956
  %1000 = vst.msk [vmem:[#allocation2 + $0x80] sm:$0xff] %vm983, %v957
  %1001 = vst.msk [vmem:[#allocation2 + $0x88] sm:$0xff] %vm983, %v958
  %1002 = vst.msk [vmem:[#allocation2 + $0x90] sm:$0xff] %vm983, %v959
  %1003 = vst.msk [vmem:[#allocation2 + $0x98] sm:$0xff] %vm983, %v960
  %1004 = vst.msk [vmem:[#allocation2 + $0xa0] sm:$0xff] %vm983, %v961
  %1005 = vst.msk [vmem:[#allocation2 + $0xa8] sm:$0xff] %vm983, %v962
  %1006 = vst.msk [vmem:[#allocation2 + $0xb0] sm:$0xff] %vm983, %v963
  %1007 = vst.msk [vmem:[#allocation2 + $0xb8] sm:$0xff] %vm983, %v964
  %1008 = vst.msk [vmem:[#allocation2 + $0xc0] sm:$0xff] %vm983, %v965
  %1009 = vst.msk [vmem:[#allocation2 + $0xc8] sm:$0xff] %vm983, %v966
  %1010 = vst.msk [vmem:[#allocation2 + $0xd0] sm:$0xff] %vm983, %v967
  %1011 = vst.msk [vmem:[#allocation2 + $0xd8] sm:$0xff] %vm983, %v968
  %1012 = vst.msk [vmem:[#allocation2 + $0xe0] sm:$0xff] %vm983, %v969
  %1013 = vst.msk [vmem:[#allocation2 + $0xe8] sm:$0xff] %vm983, %v970
  %1014 = vst.msk [vmem:[#allocation2 + $0xf0] sm:$0xff] %vm983, %v971
  %1015 = vst.msk [vmem:[#allocation2 + $0xf8] sm:$0xff] %vm983, %v972
  %1016 = vst.msk [vmem:[#allocation2 + $0x100] sm:$0xff] %vm983, %v973
  %1017 = vst.msk [vmem:[#allocation2 + $0x108] sm:$0xff] %vm983, %v974
  %1018 = vst.msk [vmem:[#allocation2 + $0x110] sm:$0xff] %vm983, %v975
  %1019 = vst.msk [vmem:[#allocation2 + $0x118] sm:$0xff] %vm983, %v976
  %1020 = vst.msk [vmem:[#allocation2 + $0x120] sm:$0xff] %vm983, %v977
  %1021 = vst.msk [vmem:[#allocation2 + $0x128] sm:$0xff] %vm983, %v978
  %1022 = vst.msk [vmem:[#allocation2 + $0x130] sm:$0xff] %vm983, %v979
  %1023 = vst.msk [vmem:[#allocation2 + $0x138] sm:$0xff] %vm983, %v980
  %1024 = vst.msk [vmem:[#allocation2 + $0x140] sm:$0xff] %vm983, %v981
  %1025 = vst.msk [vmem:[#allocation2 + $0x148] sm:$0xff] %vm983, %v982
  %v1026 = vld [vmem:[#allocation2] sm:$0xff]
  %v1027 = vld [vmem:[#allocation2 + $0x8] sm:$0xff]
  %v1028 = vld [vmem:[#allocation2 + $0x10] sm:$0xff]
  %v1029 = vld [vmem:[#allocation2 + $0x18] sm:$0xff]
  %v1030 = vld [vmem:[#allocation2 + $0x20] sm:$0xff]
  %v1031 = vld [vmem:[#allocation2 + $0x28] sm:$0xff]
  %v1032 = vld [vmem:[#allocation2 + $0x30] sm:$0xff]
  %v1033 = vld [vmem:[#allocation2 + $0x38] sm:$0xff]
  %v1034 = vld [vmem:[#allocation2 + $0x40] sm:$0xff]
  %v1035 = vld [vmem:[#allocation2 + $0x48] sm:$0xff]
  %v1036 = vld [vmem:[#allocation2 + $0x50] sm:$0xff]
  %v1037 = vld [vmem:[#allocation2 + $0x58] sm:$0xff]
  %v1038 = vld [vmem:[#allocation2 + $0x60] sm:$0xff]
  %v1039 = vld [vmem:[#allocation2 + $0x68] sm:$0xff]
  %v1040 = vld [vmem:[#allocation2 + $0x70] sm:$0xff]
  %v1041 = vld [vmem:[#allocation2 + $0x78] sm:$0xff]
  %v1042 = vld [vmem:[#allocation2 + $0x80] sm:$0xff]
  %v1043 = vld [vmem:[#allocation2 + $0x88] sm:$0xff]
  %v1044 = vld [vmem:[#allocation2 + $0x90] sm:$0xff]
  %v1045 = vld [vmem:[#allocation2 + $0x98] sm:$0xff]
  %v1046 = vld [vmem:[#allocation2 + $0xa0] sm:$0xff]
  %v1047 = vld [vmem:[#allocation2 + $0xa8] sm:$0xff]
  %v1048 = vld [vmem:[#allocation2 + $0xb0] sm:$0xff]
  %v1049 = vld [vmem:[#allocation2 + $0xb8] sm:$0xff]
  %1050 = vst.msk [vmem:[#allocation3] sm:$0xff] %vm983, %v1026
  %1051 = vst.msk [vmem:[#allocation3 + $0x18] sm:$0xff] %vm983, %v1027
  %1052 = vst.msk [vmem:[#allocation3 + $0x30] sm:$0xff] %vm983, %v1028
  %1053 = vst.msk [vmem:[#allocation3 + $0x48] sm:$0xff] %vm983, %v1029
  %1054 = vst.msk [vmem:[#allocation3 + $0x60] sm:$0xff] %vm983, %v1030
  %1055 = vst.msk [vmem:[#allocation3 + $0x78] sm:$0xff] %vm983, %v1031
  %1056 = vst.msk [vmem:[#allocation3 + $0x90] sm:$0xff] %vm983, %v1032
  %1057 = vst.msk [vmem:[#allocation3 + $0xa8] sm:$0xff] %vm983, %v1033
  %1058 = vst.msk [vmem:[#allocation3 + $0xc0] sm:$0xff] %vm983, %v1034
  %1059 = vst.msk [vmem:[#allocation3 + $0xd8] sm:$0xff] %vm983, %v1035
  %1060 = vst.msk [vmem:[#allocation3 + $0xf0] sm:$0xff] %vm983, %v1036
  %1061 = vst.msk [vmem:[#allocation3 + $0x108] sm:$0xff] %vm983, %v1037
  %1062 = vst.msk [vmem:[#allocation3 + $0x120] sm:$0xff] %vm983, %v1038
  %1063 = vst.msk [vmem:[#allocation3 + $0x138] sm:$0xff] %vm983, %v1039
  %1064 = vst.msk [vmem:[#allocation3 + $0x150] sm:$0xff] %vm983, %v1040
  %1065 = vst.msk [vmem:[#allocation3 + $0x168] sm:$0xff] %vm983, %v1041
  %1066 = vst.msk [vmem:[#allocation3 + $0x180] sm:$0xff] %vm983, %v1042
  %1067 = vst.msk [vmem:[#allocation3 + $0x198] sm:$0xff] %vm983, %v1043
  %1068 = vst.msk [vmem:[#allocation3 + $0x1b0] sm:$0xff] %vm983, %v1044
  %1069 = vst.msk [vmem:[#allocation3 + $0x1c8] sm:$0xff] %vm983, %v1045
  %1070 = vst.msk [vmem:[#allocation3 + $0x1e0] sm:$0xff] %vm983, %v1046
  %1071 = vst.msk [vmem:[#allocation3 + $0x1f8] sm:$0xff] %vm983, %v1047
  %1072 = vst.msk [vmem:[#allocation3 + $0x210] sm:$0xff] %vm983, %v1048
  %1073 = vst.msk [vmem:[#allocation3 + $0x228] sm:$0xff] %vm983, %v1049
  %v1074 = vld [vmem:[#allocation2 + $0x8] sm:$0xff]
  %v1075 = vld [vmem:[#allocation2 + $0x10] sm:$0xff]
  %v1076 = vld [vmem:[#allocation2 + $0x18] sm:$0xff]
  %v1077 = vld [vmem:[#allocation2 + $0x20] sm:$0xff]
  %v1078 = vld [vmem:[#allocation2 + $0x28] sm:$0xff]
  %v1079 = vld [vmem:[#allocation2 + $0x30] sm:$0xff]
  %v1080 = vld [vmem:[#allocation2 + $0x38] sm:$0xff]
  %v1081 = vld [vmem:[#allocation2 + $0x40] sm:$0xff]
  %v1082 = vld [vmem:[#allocation2 + $0x48] sm:$0xff]
  %v1083 = vld [vmem:[#allocation2 + $0x50] sm:$0xff]
  %v1084 = vld [vmem:[#allocation2 + $0x58] sm:$0xff]
  %v1085 = vld [vmem:[#allocation2 + $0x60] sm:$0xff]
  %v1086 = vld [vmem:[#allocation2 + $0x68] sm:$0xff]
  %v1087 = vld [vmem:[#allocation2 + $0x70] sm:$0xff]
  %v1088 = vld [vmem:[#allocation2 + $0x78] sm:$0xff]
  %v1089 = vld [vmem:[#allocation2 + $0x80] sm:$0xff]
  %v1090 = vld [vmem:[#allocation2 + $0x88] sm:$0xff]
  %v1091 = vld [vmem:[#allocation2 + $0x90] sm:$0xff]
  %v1092 = vld [vmem:[#allocation2 + $0x98] sm:$0xff]
  %v1093 = vld [vmem:[#allocation2 + $0xa0] sm:$0xff]
  %v1094 = vld [vmem:[#allocation2 + $0xa8] sm:$0xff]
  %v1095 = vld [vmem:[#allocation2 + $0xb0] sm:$0xff]
  %v1096 = vld [vmem:[#allocation2 + $0xb8] sm:$0xff]
  %v1097 = vld [vmem:[#allocation2 + $0xc0] sm:$0xff]
  %1122 = vrot.lane.b32.xlu0 %v1074, 32
  %v1123 = vpop.permute.xlu0 %1122
  %1124 = vrot.lane.b32.xlu0 %v1075, 32
  %v1125 = vpop.permute.xlu0 %1124
  %1126 = vrot.lane.b32.xlu0 %v1076, 32
  %v1127 = vpop.permute.xlu0 %1126
  %1128 = vrot.lane.b32.xlu0 %v1077, 32
  %v1129 = vpop.permute.xlu0 %1128
  %1130 = vrot.lane.b32.xlu0 %v1078, 32
  %v1131 = vpop.permute.xlu0 %1130
  %1132 = vrot.lane.b32.xlu0 %v1079, 32
  %v1133 = vpop.permute.xlu0 %1132
  %1134 = vrot.lane.b32.xlu0 %v1080, 32
  %v1135 = vpop.permute.xlu0 %1134
  %1136 = vrot.lane.b32.xlu0 %v1081, 32
  %v1137 = vpop.permute.xlu0 %1136
  %1138 = vrot.lane.b32.xlu0 %v1082, 32
  %v1139 = vpop.permute.xlu0 %1138
  %1140 = vrot.lane.b32.xlu0 %v1083, 32
  %v1141 = vpop.permute.xlu0 %1140
  %1142 = vrot.lane.b32.xlu0 %v1084, 32
  %v1143 = vpop.permute.xlu0 %1142
  %1144 = vrot.lane.b32.xlu0 %v1085, 32
  %v1145 = vpop.permute.xlu0 %1144
  %1146 = vrot.lane.b32.xlu0 %v1086, 32
  %v1147 = vpop.permute.xlu0 %1146
  %1148 = vrot.lane.b32.xlu0 %v1087, 32
  %v1149 = vpop.permute.xlu0 %1148
  %1150 = vrot.lane.b32.xlu0 %v1088, 32
  %v1151 = vpop.permute.xlu0 %1150
  %1152 = vrot.lane.b32.xlu0 %v1089, 32
  %v1153 = vpop.permute.xlu0 %1152
  %1154 = vrot.lane.b32.xlu0 %v1090, 32
  %v1155 = vpop.permute.xlu0 %1154
  %1156 = vrot.lane.b32.xlu0 %v1091, 32
  %v1157 = vpop.permute.xlu0 %1156
  %1158 = vrot.lane.b32.xlu0 %v1092, 32
  %v1159 = vpop.permute.xlu0 %1158
  %1160 = vrot.lane.b32.xlu0 %v1093, 32
  %v1161 = vpop.permute.xlu0 %1160
  %1162 = vrot.lane.b32.xlu0 %v1094, 32
  %v1163 = vpop.permute.xlu0 %1162
  %1164 = vrot.lane.b32.xlu0 %v1095, 32
  %v1165 = vpop.permute.xlu0 %1164
  %1166 = vrot.lane.b32.xlu0 %v1096, 32
  %v1167 = vpop.permute.xlu0 %1166
  %1168 = vrot.lane.b32.xlu0 %v1097, 32
  %v1169 = vpop.permute.xlu0 %1168
  %vm1194 = vcmask 523520
  %1195 = vst.msk [vmem:[#allocation3] sm:$0xff] %vm1194, %v1123
  %1196 = vst.msk [vmem:[#allocation3 + $0x18] sm:$0xff] %vm1194, %v1125
  %1197 = vst.msk [vmem:[#allocation3 + $0x30] sm:$0xff] %vm1194, %v1127
  %1198 = vst.msk [vmem:[#allocation3 + $0x48] sm:$0xff] %vm1194, %v1129
  %1199 = vst.msk [vmem:[#allocation3 + $0x60] sm:$0xff] %vm1194, %v1131
  %1200 = vst.msk [vmem:[#allocation3 + $0x78] sm:$0xff] %vm1194, %v1133
  %1201 = vst.msk [vmem:[#allocation3 + $0x90] sm:$0xff] %vm1194, %v1135
  %1202 = vst.msk [vmem:[#allocation3 + $0xa8] sm:$0xff] %vm1194, %v1137
  %1203 = vst.msk [vmem:[#allocation3 + $0xc0] sm:$0xff] %vm1194, %v1139
  %1204 = vst.msk [vmem:[#allocation3 + $0xd8] sm:$0xff] %vm1194, %v1141
  %1205 = vst.msk [vmem:[#allocation3 + $0xf0] sm:$0xff] %vm1194, %v1143
  %1206 = vst.msk [vmem:[#allocation3 + $0x108] sm:$0xff] %vm1194, %v1145
  %1207 = vst.msk [vmem:[#allocation3 + $0x120] sm:$0xff] %vm1194, %v1147
  %1208 = vst.msk [vmem:[#allocation3 + $0x138] sm:$0xff] %vm1194, %v1149
  %1209 = vst.msk [vmem:[#allocation3 + $0x150] sm:$0xff] %vm1194, %v1151
  %1210 = vst.msk [vmem:[#allocation3 + $0x168] sm:$0xff] %vm1194, %v1153
  %1211 = vst.msk [vmem:[#allocation3 + $0x180] sm:$0xff] %vm1194, %v1155
  %1212 = vst.msk [vmem:[#allocation3 + $0x198] sm:$0xff] %vm1194, %v1157
  %1213 = vst.msk [vmem:[#allocation3 + $0x1b0] sm:$0xff] %vm1194, %v1159
  %1214 = vst.msk [vmem:[#allocation3 + $0x1c8] sm:$0xff] %vm1194, %v1161
  %1215 = vst.msk [vmem:[#allocation3 + $0x1e0] sm:$0xff] %vm1194, %v1163
  %1216 = vst.msk [vmem:[#allocation3 + $0x1f8] sm:$0xff] %vm1194, %v1165
  %1217 = vst.msk [vmem:[#allocation3 + $0x210] sm:$0xff] %vm1194, %v1167
  %1218 = vst.msk [vmem:[#allocation3 + $0x228] sm:$0xff] %vm1194, %v1169
  %v1219 = vld [vmem:[#allocation2 + $0x10] sm:$0xff]
  %v1220 = vld [vmem:[#allocation2 + $0x18] sm:$0xff]
  %v1221 = vld [vmem:[#allocation2 + $0x20] sm:$0xff]
  %v1222 = vld [vmem:[#allocation2 + $0x28] sm:$0xff]
  %v1223 = vld [vmem:[#allocation2 + $0x30] sm:$0xff]
  %v1224 = vld [vmem:[#allocation2 + $0x38] sm:$0xff]
  %v1225 = vld [vmem:[#allocation2 + $0x40] sm:$0xff]
  %v1226 = vld [vmem:[#allocation2 + $0x48] sm:$0xff]
  %v1227 = vld [vmem:[#allocation2 + $0x50] sm:$0xff]
  %v1228 = vld [vmem:[#allocation2 + $0x58] sm:$0xff]
  %v1229 = vld [vmem:[#allocation2 + $0x60] sm:$0xff]
  %v1230 = vld [vmem:[#allocation2 + $0x68] sm:$0xff]
  %v1231 = vld [vmem:[#allocation2 + $0x70] sm:$0xff]
  %v1232 = vld [vmem:[#allocation2 + $0x78] sm:$0xff]
  %v1233 = vld [vmem:[#allocation2 + $0x80] sm:$0xff]
  %v1234 = vld [vmem:[#allocation2 + $0x88] sm:$0xff]
  %v1235 = vld [vmem:[#allocation2 + $0x90] sm:$0xff]
  %v1236 = vld [vmem:[#allocation2 + $0x98] sm:$0xff]
  %v1237 = vld [vmem:[#allocation2 + $0xa0] sm:$0xff]
  %v1238 = vld [vmem:[#allocation2 + $0xa8] sm:$0xff]
  %v1239 = vld [vmem:[#allocation2 + $0xb0] sm:$0xff]
  %v1240 = vld [vmem:[#allocation2 + $0xb8] sm:$0xff]
  %v1241 = vld [vmem:[#allocation2 + $0xc0] sm:$0xff]
  %v1242 = vld [vmem:[#allocation2 + $0xc8] sm:$0xff]
  %1267 = vrot.lane.b32.xlu0 %v1219, 64
  %v1268 = vpop.permute.xlu0 %1267
  %1269 = vrot.lane.b32.xlu0 %v1220, 64
  %v1270 = vpop.permute.xlu0 %1269
  %1271 = vrot.lane.b32.xlu0 %v1221, 64
  %v1272 = vpop.permute.xlu0 %1271
  %1273 = vrot.lane.b32.xlu0 %v1222, 64
  %v1274 = vpop.permute.xlu0 %1273
  %1275 = vrot.lane.b32.xlu0 %v1223, 64
  %v1276 = vpop.permute.xlu0 %1275
  %1277 = vrot.lane.b32.xlu0 %v1224, 64
  %v1278 = vpop.permute.xlu0 %1277
  %1279 = vrot.lane.b32.xlu0 %v1225, 64
  %v1280 = vpop.permute.xlu0 %1279
  %1281 = vrot.lane.b32.xlu0 %v1226, 64
  %v1282 = vpop.permute.xlu0 %1281
  %1283 = vrot.lane.b32.xlu0 %v1227, 64
  %v1284 = vpop.permute.xlu0 %1283
  %1285 = vrot.lane.b32.xlu0 %v1228, 64
  %v1286 = vpop.permute.xlu0 %1285
  %1287 = vrot.lane.b32.xlu0 %v1229, 64
  %v1288 = vpop.permute.xlu0 %1287
  %1289 = vrot.lane.b32.xlu0 %v1230, 64
  %v1290 = vpop.permute.xlu0 %1289
  %1291 = vrot.lane.b32.xlu0 %v1231, 64
  %v1292 = vpop.permute.xlu0 %1291
  %1293 = vrot.lane.b32.xlu0 %v1232, 64
  %v1294 = vpop.permute.xlu0 %1293
  %1295 = vrot.lane.b32.xlu0 %v1233, 64
  %v1296 = vpop.permute.xlu0 %1295
  %1297 = vrot.lane.b32.xlu0 %v1234, 64
  %v1298 = vpop.permute.xlu0 %1297
  %1299 = vrot.lane.b32.xlu0 %v1235, 64
  %v1300 = vpop.permute.xlu0 %1299
  %1301 = vrot.lane.b32.xlu0 %v1236, 64
  %v1302 = vpop.permute.xlu0 %1301
  %1303 = vrot.lane.b32.xlu0 %v1237, 64
  %v1304 = vpop.permute.xlu0 %1303
  %1305 = vrot.lane.b32.xlu0 %v1238, 64
  %v1306 = vpop.permute.xlu0 %1305
  %1307 = vrot.lane.b32.xlu0 %v1239, 64
  %v1308 = vpop.permute.xlu0 %1307
  %1309 = vrot.lane.b32.xlu0 %v1240, 64
  %v1310 = vpop.permute.xlu0 %1309
  %1311 = vrot.lane.b32.xlu0 %v1241, 64
  %v1312 = vpop.permute.xlu0 %1311
  %1313 = vrot.lane.b32.xlu0 %v1242, 64
  %v1314 = vpop.permute.xlu0 %1313
  %vm1339 = vcmask 785920
  %1340 = vst.msk [vmem:[#allocation3] sm:$0xff] %vm1339, %v1268
  %1341 = vst.msk [vmem:[#allocation3 + $0x18] sm:$0xff] %vm1339, %v1270
  %1342 = vst.msk [vmem:[#allocation3 + $0x30] sm:$0xff] %vm1339, %v1272
  %1343 = vst.msk [vmem:[#allocation3 + $0x48] sm:$0xff] %vm1339, %v1274
  %1344 = vst.msk [vmem:[#allocation3 + $0x60] sm:$0xff] %vm1339, %v1276
  %1345 = vst.msk [vmem:[#allocation3 + $0x78] sm:$0xff] %vm1339, %v1278
  %1346 = vst.msk [vmem:[#allocation3 + $0x90] sm:$0xff] %vm1339, %v1280
  %1347 = vst.msk [vmem:[#allocation3 + $0xa8] sm:$0xff] %vm1339, %v1282
  %1348 = vst.msk [vmem:[#allocation3 + $0xc0] sm:$0xff] %vm1339, %v1284
  %1349 = vst.msk [vmem:[#allocation3 + $0xd8] sm:$0xff] %vm1339, %v1286
  %1350 = vst.msk [vmem:[#allocation3 + $0xf0] sm:$0xff] %vm1339, %v1288
  %1351 = vst.msk [vmem:[#allocation3 + $0x108] sm:$0xff] %vm1339, %v1290
  %1352 = vst.msk [vmem:[#allocation3 + $0x120] sm:$0xff] %vm1339, %v1292
  %1353 = vst.msk [vmem:[#allocation3 + $0x138] sm:$0xff] %vm1339, %v1294
  %1354 = vst.msk [vmem:[#allocation3 + $0x150] sm:$0xff] %vm1339, %v1296
  %1355 = vst.msk [vmem:[#allocation3 + $0x168] sm:$0xff] %vm1339, %v1298
  %1356 = vst.msk [vmem:[#allocation3 + $0x180] sm:$0xff] %vm1339, %v1300
  %1357 = vst.msk [vmem:[#allocation3 + $0x198] sm:$0xff] %vm1339, %v1302
  %1358 = vst.msk [vmem:[#allocation3 + $0x1b0] sm:$0xff] %vm1339, %v1304
  %1359 = vst.msk [vmem:[#allocation3 + $0x1c8] sm:$0xff] %vm1339, %v1306
  %1360 = vst.msk [vmem:[#allocation3 + $0x1e0] sm:$0xff] %vm1339, %v1308
  %1361 = vst.msk [vmem:[#allocation3 + $0x1f8] sm:$0xff] %vm1339, %v1310
  %1362 = vst.msk [vmem:[#allocation3 + $0x210] sm:$0xff] %vm1339, %v1312
  %1363 = vst.msk [vmem:[#allocation3 + $0x228] sm:$0xff] %vm1339, %v1314
  %v1364 = vld [vmem:[#allocation2 + $0x30] sm:$0xff]
  %v1365 = vld [vmem:[#allocation2 + $0x38] sm:$0xff]
  %v1366 = vld [vmem:[#allocation2 + $0x40] sm:$0xff]
  %v1367 = vld [vmem:[#allocation2 + $0x48] sm:$0xff]
  %v1368 = vld [vmem:[#allocation2 + $0x50] sm:$0xff]
  %v1369 = vld [vmem:[#allocation2 + $0x58] sm:$0xff]
  %v1370 = vld [vmem:[#allocation2 + $0x60] sm:$0xff]
  %v1371 = vld [vmem:[#allocation2 + $0x68] sm:$0xff]
  %v1372 = vld [vmem:[#allocation2 + $0x70] sm:$0xff]
  %v1373 = vld [vmem:[#allocation2 + $0x78] sm:$0xff]
  %v1374 = vld [vmem:[#allocation2 + $0x80] sm:$0xff]
  %v1375 = vld [vmem:[#allocation2 + $0x88] sm:$0xff]
  %v1376 = vld [vmem:[#allocation2 + $0x90] sm:$0xff]
  %v1377 = vld [vmem:[#allocation2 + $0x98] sm:$0xff]
  %v1378 = vld [vmem:[#allocation2 + $0xa0] sm:$0xff]
  %v1379 = vld [vmem:[#allocation2 + $0xa8] sm:$0xff]
  %v1380 = vld [vmem:[#allocation2 + $0xb0] sm:$0xff]
  %v1381 = vld [vmem:[#allocation2 + $0xb8] sm:$0xff]
  %v1382 = vld [vmem:[#allocation2 + $0xc0] sm:$0xff]
  %v1383 = vld [vmem:[#allocation2 + $0xc8] sm:$0xff]
  %v1384 = vld [vmem:[#allocation2 + $0xd0] sm:$0xff]
  %v1385 = vld [vmem:[#allocation2 + $0xd8] sm:$0xff]
  %v1386 = vld [vmem:[#allocation2 + $0xe0] sm:$0xff]
  %v1387 = vld [vmem:[#allocation2 + $0xe8] sm:$0xff]
  %1412 = vrot.lane.b32.xlu0 %v1364, 96
  %v1413 = vpop.permute.xlu0 %1412
  %1414 = vrot.lane.b32.xlu0 %v1365, 96
  %v1415 = vpop.permute.xlu0 %1414
  %1416 = vrot.lane.b32.xlu0 %v1366, 96
  %v1417 = vpop.permute.xlu0 %1416
  %1418 = vrot.lane.b32.xlu0 %v1367, 96
  %v1419 = vpop.permute.xlu0 %1418
  %1420 = vrot.lane.b32.xlu0 %v1368, 96
  %v1421 = vpop.permute.xlu0 %1420
  %1422 = vrot.lane.b32.xlu0 %v1369, 96
  %v1423 = vpop.permute.xlu0 %1422
  %1424 = vrot.lane.b32.xlu0 %v1370, 96
  %v1425 = vpop.permute.xlu0 %1424
  %1426 = vrot.lane.b32.xlu0 %v1371, 96
  %v1427 = vpop.permute.xlu0 %1426
  %1428 = vrot.lane.b32.xlu0 %v1372, 96
  %v1429 = vpop.permute.xlu0 %1428
  %1430 = vrot.lane.b32.xlu0 %v1373, 96
  %v1431 = vpop.permute.xlu0 %1430
  %1432 = vrot.lane.b32.xlu0 %v1374, 96
  %v1433 = vpop.permute.xlu0 %1432
  %1434 = vrot.lane.b32.xlu0 %v1375, 96
  %v1435 = vpop.permute.xlu0 %1434
  %1436 = vrot.lane.b32.xlu0 %v1376, 96
  %v1437 = vpop.permute.xlu0 %1436
  %1438 = vrot.lane.b32.xlu0 %v1377, 96
  %v1439 = vpop.permute.xlu0 %1438
  %1440 = vrot.lane.b32.xlu0 %v1378, 96
  %v1441 = vpop.permute.xlu0 %1440
  %1442 = vrot.lane.b32.xlu0 %v1379, 96
  %v1443 = vpop.permute.xlu0 %1442
  %1444 = vrot.lane.b32.xlu0 %v1380, 96
  %v1445 = vpop.permute.xlu0 %1444
  %1446 = vrot.lane.b32.xlu0 %v1381, 96
  %v1447 = vpop.permute.xlu0 %1446
  %1448 = vrot.lane.b32.xlu0 %v1382, 96
  %v1449 = vpop.permute.xlu0 %1448
  %1450 = vrot.lane.b32.xlu0 %v1383, 96
  %v1451 = vpop.permute.xlu0 %1450
  %1452 = vrot.lane.b32.xlu0 %v1384, 96
  %v1453 = vpop.permute.xlu0 %1452
  %1454 = vrot.lane.b32.xlu0 %v1385, 96
  %v1455 = vpop.permute.xlu0 %1454
  %1456 = vrot.lane.b32.xlu0 %v1386, 96
  %v1457 = vpop.permute.xlu0 %1456
  %1458 = vrot.lane.b32.xlu0 %v1387, 96
  %v1459 = vpop.permute.xlu0 %1458
  %vm1484 = vcmask 1048320
  %1485 = vst.msk [vmem:[#allocation3] sm:$0xff] %vm1484, %v1413
  %1486 = vst.msk [vmem:[#allocation3 + $0x18] sm:$0xff] %vm1484, %v1415
  %1487 = vst.msk [vmem:[#allocation3 + $0x30] sm:$0xff] %vm1484, %v1417
  %1488 = vst.msk [vmem:[#allocation3 + $0x48] sm:$0xff] %vm1484, %v1419
  %1489 = vst.msk [vmem:[#allocation3 + $0x60] sm:$0xff] %vm1484, %v1421
  %1490 = vst.msk [vmem:[#allocation3 + $0x78] sm:$0xff] %vm1484, %v1423
  %1491 = vst.msk [vmem:[#allocation3 + $0x90] sm:$0xff] %vm1484, %v1425
  %1492 = vst.msk [vmem:[#allocation3 + $0xa8] sm:$0xff] %vm1484, %v1427
  %1493 = vst.msk [vmem:[#allocation3 + $0xc0] sm:$0xff] %vm1484, %v1429
  %1494 = vst.msk [vmem:[#allocation3 + $0xd8] sm:$0xff] %vm1484, %v1431
  %1495 = vst.msk [vmem:[#allocation3 + $0xf0] sm:$0xff] %vm1484, %v1433
  %1496 = vst.msk [vmem:[#allocation3 + $0x108] sm:$0xff] %vm1484, %v1435
  %1497 = vst.msk [vmem:[#allocation3 + $0x120] sm:$0xff] %vm1484, %v1437
  %1498 = vst.msk [vmem:[#allocation3 + $0x138] sm:$0xff] %vm1484, %v1439
  %1499 = vst.msk [vmem:[#allocation3 + $0x150] sm:$0xff] %vm1484, %v1441
  %1500 = vst.msk [vmem:[#allocation3 + $0x168] sm:$0xff] %vm1484, %v1443
  %1501 = vst.msk [vmem:[#allocation3 + $0x180] sm:$0xff] %vm1484, %v1445
  %1502 = vst.msk [vmem:[#allocation3 + $0x198] sm:$0xff] %vm1484, %v1447
  %1503 = vst.msk [vmem:[#allocation3 + $0x1b0] sm:$0xff] %vm1484, %v1449
  %1504 = vst.msk [vmem:[#allocation3 + $0x1c8] sm:$0xff] %vm1484, %v1451
  %1505 = vst.msk [vmem:[#allocation3 + $0x1e0] sm:$0xff] %vm1484, %v1453
  %1506 = vst.msk [vmem:[#allocation3 + $0x1f8] sm:$0xff] %vm1484, %v1455
  %1507 = vst.msk [vmem:[#allocation3 + $0x210] sm:$0xff] %vm1484, %v1457
  %1508 = vst.msk [vmem:[#allocation3 + $0x228] sm:$0xff] %vm1484, %v1459
  %v1509 = vld [vmem:[#allocation2 + $0x38] sm:$0xff]
  %v1510 = vld [vmem:[#allocation2 + $0x40] sm:$0xff]
  %v1511 = vld [vmem:[#allocation2 + $0x48] sm:$0xff]
  %v1512 = vld [vmem:[#allocation2 + $0x50] sm:$0xff]
  %v1513 = vld [vmem:[#allocation2 + $0x58] sm:$0xff]
  %v1514 = vld [vmem:[#allocation2 + $0x60] sm:$0xff]
  %v1515 = vld [vmem:[#allocation2 + $0x68] sm:$0xff]
  %v1516 = vld [vmem:[#allocation2 + $0x70] sm:$0xff]
  %v1517 = vld [vmem:[#allocation2 + $0x78] sm:$0xff]
  %v1518 = vld [vmem:[#allocation2 + $0x80] sm:$0xff]
  %v1519 = vld [vmem:[#allocation2 + $0x88] sm:$0xff]
  %v1520 = vld [vmem:[#allocation2 + $0x90] sm:$0xff]
  %v1521 = vld [vmem:[#allocation2 + $0x98] sm:$0xff]
  %v1522 = vld [vmem:[#allocation2 + $0xa0] sm:$0xff]
  %v1523 = vld [vmem:[#allocation2 + $0xa8] sm:$0xff]
  %v1524 = vld [vmem:[#allocation2 + $0xb0] sm:$0xff]
  %v1525 = vld [vmem:[#allocation2 + $0xb8] sm:$0xff]
  %v1526 = vld [vmem:[#allocation2 + $0xc0] sm:$0xff]
  %v1527 = vld [vmem:[#allocation2 + $0xc8] sm:$0xff]
  %v1528 = vld [vmem:[#allocation2 + $0xd0] sm:$0xff]
  %v1529 = vld [vmem:[#allocation2 + $0xd8] sm:$0xff]
  %v1530 = vld [vmem:[#allocation2 + $0xe0] sm:$0xff]
  %v1531 = vld [vmem:[#allocation2 + $0xe8] sm:$0xff]
  %v1532 = vld [vmem:[#allocation2 + $0xf0] sm:$0xff]
  %1533 = vst.msk [vmem:[#allocation3 + $0x8] sm:$0xff] %vm983, %v1509
  %1534 = vst.msk [vmem:[#allocation3 + $0x20] sm:$0xff] %vm983, %v1510
  %1535 = vst.msk [vmem:[#allocation3 + $0x38] sm:$0xff] %vm983, %v1511
  %1536 = vst.msk [vmem:[#allocation3 + $0x50] sm:$0xff] %vm983, %v1512
  %1537 = vst.msk [vmem:[#allocation3 + $0x68] sm:$0xff] %vm983, %v1513
  %1538 = vst.msk [vmem:[#allocation3 + $0x80] sm:$0xff] %vm983, %v1514
  %1539 = vst.msk [vmem:[#allocation3 + $0x98] sm:$0xff] %vm983, %v1515
  %1540 = vst.msk [vmem:[#allocation3 + $0xb0] sm:$0xff] %vm983, %v1516
  %1541 = vst.msk [vmem:[#allocation3 + $0xc8] sm:$0xff] %vm983, %v1517
  %1542 = vst.msk [vmem:[#allocation3 + $0xe0] sm:$0xff] %vm983, %v1518
  %1543 = vst.msk [vmem:[#allocation3 + $0xf8] sm:$0xff] %vm983, %v1519
  %1544 = vst.msk [vmem:[#allocation3 + $0x110] sm:$0xff] %vm983, %v1520
  %1545 = vst.msk [vmem:[#allocation3 + $0x128] sm:$0xff] %vm983, %v1521
  %1546 = vst.msk [vmem:[#allocation3 + $0x140] sm:$0xff] %vm983, %v1522
  %1547 = vst.msk [vmem:[#allocation3 + $0x158] sm:$0xff] %vm983, %v1523
  %1548 = vst.msk [vmem:[#allocation3 + $0x170] sm:$0xff] %vm983, %v1524
  %1549 = vst.msk [vmem:[#allocation3 + $0x188] sm:$0xff] %vm983, %v1525
  %1550 = vst.msk [vmem:[#allocation3 + $0x1a0] sm:$0xff] %vm983, %v1526
  %1551 = vst.msk [vmem:[#allocation3 + $0x1b8] sm:$0xff] %vm983, %v1527
  %1552 = vst.msk [vmem:[#allocation3 + $0x1d0] sm:$0xff] %vm983, %v1528
  %1553 = vst.msk [vmem:[#allocation3 + $0x1e8] sm:$0xff] %vm983, %v1529
  %1554 = vst.msk [vmem:[#allocation3 + $0x200] sm:$0xff] %vm983, %v1530
  %1555 = vst.msk [vmem:[#allocation3 + $0x218] sm:$0xff] %vm983, %v1531
  %1556 = vst.msk [vmem:[#allocation3 + $0x230] sm:$0xff] %vm983, %v1532
  %v1557 = vld [vmem:[#allocation2 + $0x40] sm:$0xff]
  %v1558 = vld [vmem:[#allocation2 + $0x48] sm:$0xff]
  %v1559 = vld [vmem:[#allocation2 + $0x50] sm:$0xff]
  %v1560 = vld [vmem:[#allocation2 + $0x58] sm:$0xff]
  %v1561 = vld [vmem:[#allocation2 + $0x60] sm:$0xff]
  %v1562 = vld [vmem:[#allocation2 + $0x68] sm:$0xff]
  %v1563 = vld [vmem:[#allocation2 + $0x70] sm:$0xff]
  %v1564 = vld [vmem:[#allocation2 + $0x78] sm:$0xff]
  %v1565 = vld [vmem:[#allocation2 + $0x80] sm:$0xff]
  %v1566 = vld [vmem:[#allocation2 + $0x88] sm:$0xff]
  %v1567 = vld [vmem:[#allocation2 + $0x90] sm:$0xff]
  %v1568 = vld [vmem:[#allocation2 + $0x98] sm:$0xff]
  %v1569 = vld [vmem:[#allocation2 + $0xa0] sm:$0xff]
  %v1570 = vld [vmem:[#allocation2 + $0xa8] sm:$0xff]
  %v1571 = vld [vmem:[#allocation2 + $0xb0] sm:$0xff]
  %v1572 = vld [vmem:[#allocation2 + $0xb8] sm:$0xff]
  %v1573 = vld [vmem:[#allocation2 + $0xc0] sm:$0xff]
  %v1574 = vld [vmem:[#allocation2 + $0xc8] sm:$0xff]
  %v1575 = vld [vmem:[#allocation2 + $0xd0] sm:$0xff]
  %v1576 = vld [vmem:[#allocation2 + $0xd8] sm:$0xff]
  %v1577 = vld [vmem:[#allocation2 + $0xe0] sm:$0xff]
  %v1578 = vld [vmem:[#allocation2 + $0xe8] sm:$0xff]
  %v1579 = vld [vmem:[#allocation2 + $0xf0] sm:$0xff]
  %v1580 = vld [vmem:[#allocation2 + $0xf8] sm:$0xff]
  %1605 = vrot.lane.b32.xlu0 %v1557, 32
  %v1606 = vpop.permute.xlu0 %1605
  %1607 = vrot.lane.b32.xlu0 %v1558, 32
  %v1608 = vpop.permute.xlu0 %1607
  %1609 = vrot.lane.b32.xlu0 %v1559, 32
  %v1610 = vpop.permute.xlu0 %1609
  %1611 = vrot.lane.b32.xlu0 %v1560, 32
  %v1612 = vpop.permute.xlu0 %1611
  %1613 = vrot.lane.b32.xlu0 %v1561, 32
  %v1614 = vpop.permute.xlu0 %1613
  %1615 = vrot.lane.b32.xlu0 %v1562, 32
  %v1616 = vpop.permute.xlu0 %1615
  %1617 = vrot.lane.b32.xlu0 %v1563, 32
  %v1618 = vpop.permute.xlu0 %1617
  %1619 = vrot.lane.b32.xlu0 %v1564, 32
  %v1620 = vpop.permute.xlu0 %1619
  %1621 = vrot.lane.b32.xlu0 %v1565, 32
  %v1622 = vpop.permute.xlu0 %1621
  %1623 = vrot.lane.b32.xlu0 %v1566, 32
  %v1624 = vpop.permute.xlu0 %1623
  %1625 = vrot.lane.b32.xlu0 %v1567, 32
  %v1626 = vpop.permute.xlu0 %1625
  %1627 = vrot.lane.b32.xlu0 %v1568, 32
  %v1628 = vpop.permute.xlu0 %1627
  %1629 = vrot.lane.b32.xlu0 %v1569, 32
  %v1630 = vpop.permute.xlu0 %1629
  %1631 = vrot.lane.b32.xlu0 %v1570, 32
  %v1632 = vpop.permute.xlu0 %1631
  %1633 = vrot.lane.b32.xlu0 %v1571, 32
  %v1634 = vpop.permute.xlu0 %1633
  %1635 = vrot.lane.b32.xlu0 %v1572, 32
  %v1636 = vpop.permute.xlu0 %1635
  %1637 = vrot.lane.b32.xlu0 %v1573, 32
  %v1638 = vpop.permute.xlu0 %1637
  %1639 = vrot.lane.b32.xlu0 %v1574, 32
  %v1640 = vpop.permute.xlu0 %1639
  %1641 = vrot.lane.b32.xlu0 %v1575, 32
  %v1642 = vpop.permute.xlu0 %1641
  %1643 = vrot.lane.b32.xlu0 %v1576, 32
  %v1644 = vpop.permute.xlu0 %1643
  %1645 = vrot.lane.b32.xlu0 %v1577, 32
  %v1646 = vpop.permute.xlu0 %1645
  %1647 = vrot.lane.b32.xlu0 %v1578, 32
  %v1648 = vpop.permute.xlu0 %1647
  %1649 = vrot.lane.b32.xlu0 %v1579, 32
  %v1650 = vpop.permute.xlu0 %1649
  %1651 = vrot.lane.b32.xlu0 %v1580, 32
  %v1652 = vpop.permute.xlu0 %1651
  %1677 = vst.msk [vmem:[#allocation3 + $0x8] sm:$0xff] %vm1194, %v1606
  %1678 = vst.msk [vmem:[#allocation3 + $0x20] sm:$0xff] %vm1194, %v1608
  %1679 = vst.msk [vmem:[#allocation3 + $0x38] sm:$0xff] %vm1194, %v1610
  %1680 = vst.msk [vmem:[#allocation3 + $0x50] sm:$0xff] %vm1194, %v1612
  %1681 = vst.msk [vmem:[#allocation3 + $0x68] sm:$0xff] %vm1194, %v1614
  %1682 = vst.msk [vmem:[#allocation3 + $0x80] sm:$0xff] %vm1194, %v1616
  %1683 = vst.msk [vmem:[#allocation3 + $0x98] sm:$0xff] %vm1194, %v1618
  %1684 = vst.msk [vmem:[#allocation3 + $0xb0] sm:$0xff] %vm1194, %v1620
  %1685 = vst.msk [vmem:[#allocation3 + $0xc8] sm:$0xff] %vm1194, %v1622
  %1686 = vst.msk [vmem:[#allocation3 + $0xe0] sm:$0xff] %vm1194, %v1624
  %1687 = vst.msk [vmem:[#allocation3 + $0xf8] sm:$0xff] %vm1194, %v1626
  %1688 = vst.msk [vmem:[#allocation3 + $0x110] sm:$0xff] %vm1194, %v1628
  %1689 = vst.msk [vmem:[#allocation3 + $0x128] sm:$0xff] %vm1194, %v1630
  %1690 = vst.msk [vmem:[#allocation3 + $0x140] sm:$0xff] %vm1194, %v1632
  %1691 = vst.msk [vmem:[#allocation3 + $0x158] sm:$0xff] %vm1194, %v1634
  %1692 = vst.msk [vmem:[#allocation3 + $0x170] sm:$0xff] %vm1194, %v1636
  %1693 = vst.msk [vmem:[#allocation3 + $0x188] sm:$0xff] %vm1194, %v1638
  %1694 = vst.msk [vmem:[#allocation3 + $0x1a0] sm:$0xff] %vm1194, %v1640
  %1695 = vst.msk [vmem:[#allocation3 + $0x1b8] sm:$0xff] %vm1194, %v1642
  %1696 = vst.msk [vmem:[#allocation3 + $0x1d0] sm:$0xff] %vm1194, %v1644
  %1697 = vst.msk [vmem:[#allocation3 + $0x1e8] sm:$0xff] %vm1194, %v1646
  %1698 = vst.msk [vmem:[#allocation3 + $0x200] sm:$0xff] %vm1194, %v1648
  %1699 = vst.msk [vmem:[#allocation3 + $0x218] sm:$0xff] %vm1194, %v1650
  %1700 = vst.msk [vmem:[#allocation3 + $0x230] sm:$0xff] %vm1194, %v1652
  %v1701 = vld [vmem:[#allocation2 + $0x60] sm:$0xff]
  %v1702 = vld [vmem:[#allocation2 + $0x68] sm:$0xff]
  %v1703 = vld [vmem:[#allocation2 + $0x70] sm:$0xff]
  %v1704 = vld [vmem:[#allocation2 + $0x78] sm:$0xff]
  %v1705 = vld [vmem:[#allocation2 + $0x80] sm:$0xff]
  %v1706 = vld [vmem:[#allocation2 + $0x88] sm:$0xff]
  %v1707 = vld [vmem:[#allocation2 + $0x90] sm:$0xff]
  %v1708 = vld [vmem:[#allocation2 + $0x98] sm:$0xff]
  %v1709 = vld [vmem:[#allocation2 + $0xa0] sm:$0xff]
  %v1710 = vld [vmem:[#allocation2 + $0xa8] sm:$0xff]
  %v1711 = vld [vmem:[#allocation2 + $0xb0] sm:$0xff]
  %v1712 = vld [vmem:[#allocation2 + $0xb8] sm:$0xff]
  %v1713 = vld [vmem:[#allocation2 + $0xc0] sm:$0xff]
  %v1714 = vld [vmem:[#allocation2 + $0xc8] sm:$0xff]
  %v1715 = vld [vmem:[#allocation2 + $0xd0] sm:$0xff]
  %v1716 = vld [vmem:[#allocation2 + $0xd8] sm:$0xff]
  %v1717 = vld [vmem:[#allocation2 + $0xe0] sm:$0xff]
  %v1718 = vld [vmem:[#allocation2 + $0xe8] sm:$0xff]
  %v1719 = vld [vmem:[#allocation2 + $0xf0] sm:$0xff]
  %v1720 = vld [vmem:[#allocation2 + $0xf8] sm:$0xff]
  %v1721 = vld [vmem:[#allocation2 + $0x100] sm:$0xff]
  %v1722 = vld [vmem:[#allocation2 + $0x108] sm:$0xff]
  %v1723 = vld [vmem:[#allocation2 + $0x110] sm:$0xff]
  %v1724 = vld [vmem:[#allocation2 + $0x118] sm:$0xff]
  %1749 = vrot.lane.b32.xlu0 %v1701, 64
  %v1750 = vpop.permute.xlu0 %1749
  %1751 = vrot.lane.b32.xlu0 %v1702, 64
  %v1752 = vpop.permute.xlu0 %1751
  %1753 = vrot.lane.b32.xlu0 %v1703, 64
  %v1754 = vpop.permute.xlu0 %1753
  %1755 = vrot.lane.b32.xlu0 %v1704, 64
  %v1756 = vpop.permute.xlu0 %1755
  %1757 = vrot.lane.b32.xlu0 %v1705, 64
  %v1758 = vpop.permute.xlu0 %1757
  %1759 = vrot.lane.b32.xlu0 %v1706, 64
  %v1760 = vpop.permute.xlu0 %1759
  %1761 = vrot.lane.b32.xlu0 %v1707, 64
  %v1762 = vpop.permute.xlu0 %1761
  %1763 = vrot.lane.b32.xlu0 %v1708, 64
  %v1764 = vpop.permute.xlu0 %1763
  %1765 = vrot.lane.b32.xlu0 %v1709, 64
  %v1766 = vpop.permute.xlu0 %1765
  %1767 = vrot.lane.b32.xlu0 %v1710, 64
  %v1768 = vpop.permute.xlu0 %1767
  %1769 = vrot.lane.b32.xlu0 %v1711, 64
  %v1770 = vpop.permute.xlu0 %1769
  %1771 = vrot.lane.b32.xlu0 %v1712, 64
  %v1772 = vpop.permute.xlu0 %1771
  %1773 = vrot.lane.b32.xlu0 %v1713, 64
  %v1774 = vpop.permute.xlu0 %1773
  %1775 = vrot.lane.b32.xlu0 %v1714, 64
  %v1776 = vpop.permute.xlu0 %1775
  %1777 = vrot.lane.b32.xlu0 %v1715, 64
  %v1778 = vpop.permute.xlu0 %1777
  %1779 = vrot.lane.b32.xlu0 %v1716, 64
  %v1780 = vpop.permute.xlu0 %1779
  %1781 = vrot.lane.b32.xlu0 %v1717, 64
  %v1782 = vpop.permute.xlu0 %1781
  %1783 = vrot.lane.b32.xlu0 %v1718, 64
  %v1784 = vpop.permute.xlu0 %1783
  %1785 = vrot.lane.b32.xlu0 %v1719, 64
  %v1786 = vpop.permute.xlu0 %1785
  %1787 = vrot.lane.b32.xlu0 %v1720, 64
  %v1788 = vpop.permute.xlu0 %1787
  %1789 = vrot.lane.b32.xlu0 %v1721, 64
  %v1790 = vpop.permute.xlu0 %1789
  %1791 = vrot.lane.b32.xlu0 %v1722, 64
  %v1792 = vpop.permute.xlu0 %1791
  %1793 = vrot.lane.b32.xlu0 %v1723, 64
  %v1794 = vpop.permute.xlu0 %1793
  %1795 = vrot.lane.b32.xlu0 %v1724, 64
  %v1796 = vpop.permute.xlu0 %1795
  %1821 = vst.msk [vmem:[#allocation3 + $0x8] sm:$0xff] %vm1339, %v1750
  %1822 = vst.msk [vmem:[#allocation3 + $0x20] sm:$0xff] %vm1339, %v1752
  %1823 = vst.msk [vmem:[#allocation3 + $0x38] sm:$0xff] %vm1339, %v1754
  %1824 = vst.msk [vmem:[#allocation3 + $0x50] sm:$0xff] %vm1339, %v1756
  %1825 = vst.msk [vmem:[#allocation3 + $0x68] sm:$0xff] %vm1339, %v1758
  %1826 = vst.msk [vmem:[#allocation3 + $0x80] sm:$0xff] %vm1339, %v1760
  %1827 = vst.msk [vmem:[#allocation3 + $0x98] sm:$0xff] %vm1339, %v1762
  %1828 = vst.msk [vmem:[#allocation3 + $0xb0] sm:$0xff] %vm1339, %v1764
  %1829 = vst.msk [vmem:[#allocation3 + $0xc8] sm:$0xff] %vm1339, %v1766
  %1830 = vst.msk [vmem:[#allocation3 + $0xe0] sm:$0xff] %vm1339, %v1768
  %1831 = vst.msk [vmem:[#allocation3 + $0xf8] sm:$0xff] %vm1339, %v1770
  %1832 = vst.msk [vmem:[#allocation3 + $0x110] sm:$0xff] %vm1339, %v1772
  %1833 = vst.msk [vmem:[#allocation3 + $0x128] sm:$0xff] %vm1339, %v1774
  %1834 = vst.msk [vmem:[#allocation3 + $0x140] sm:$0xff] %vm1339, %v1776
  %1835 = vst.msk [vmem:[#allocation3 + $0x158] sm:$0xff] %vm1339, %v1778
  %1836 = vst.msk [vmem:[#allocation3 + $0x170] sm:$0xff] %vm1339, %v1780
  %1837 = vst.msk [vmem:[#allocation3 + $0x188] sm:$0xff] %vm1339, %v1782
  %1838 = vst.msk [vmem:[#allocation3 + $0x1a0] sm:$0xff] %vm1339, %v1784
  %1839 = vst.msk [vmem:[#allocation3 + $0x1b8] sm:$0xff] %vm1339, %v1786
  %1840 = vst.msk [vmem:[#allocation3 + $0x1d0] sm:$0xff] %vm1339, %v1788
  %1841 = vst.msk [vmem:[#allocation3 + $0x1e8] sm:$0xff] %vm1339, %v1790
  %1842 = vst.msk [vmem:[#allocation3 + $0x200] sm:$0xff] %vm1339, %v1792
  %1843 = vst.msk [vmem:[#allocation3 + $0x218] sm:$0xff] %vm1339, %v1794
  %1844 = vst.msk [vmem:[#allocation3 + $0x230] sm:$0xff] %vm1339, %v1796
  %v1845 = vld [vmem:[#allocation2 + $0x68] sm:$0xff]
  %v1846 = vld [vmem:[#allocation2 + $0x70] sm:$0xff]
  %v1847 = vld [vmem:[#allocation2 + $0x78] sm:$0xff]
  %v1848 = vld [vmem:[#allocation2 + $0x80] sm:$0xff]
  %v1849 = vld [vmem:[#allocation2 + $0x88] sm:$0xff]
  %v1850 = vld [vmem:[#allocation2 + $0x90] sm:$0xff]
  %v1851 = vld [vmem:[#allocation2 + $0x98] sm:$0xff]
  %v1852 = vld [vmem:[#allocation2 + $0xa0] sm:$0xff]
  %v1853 = vld [vmem:[#allocation2 + $0xa8] sm:$0xff]
  %v1854 = vld [vmem:[#allocation2 + $0xb0] sm:$0xff]
  %v1855 = vld [vmem:[#allocation2 + $0xb8] sm:$0xff]
  %v1856 = vld [vmem:[#allocation2 + $0xc0] sm:$0xff]
  %v1857 = vld [vmem:[#allocation2 + $0xc8] sm:$0xff]
  %v1858 = vld [vmem:[#allocation2 + $0xd0] sm:$0xff]
  %v1859 = vld [vmem:[#allocation2 + $0xd8] sm:$0xff]
  %v1860 = vld [vmem:[#allocation2 + $0xe0] sm:$0xff]
  %v1861 = vld [vmem:[#allocation2 + $0xe8] sm:$0xff]
  %v1862 = vld [vmem:[#allocation2 + $0xf0] sm:$0xff]
  %v1863 = vld [vmem:[#allocation2 + $0xf8] sm:$0xff]
  %v1864 = vld [vmem:[#allocation2 + $0x100] sm:$0xff]
  %v1865 = vld [vmem:[#allocation2 + $0x108] sm:$0xff]
  %v1866 = vld [vmem:[#allocation2 + $0x110] sm:$0xff]
  %v1867 = vld [vmem:[#allocation2 + $0x118] sm:$0xff]
  %v1868 = vld [vmem:[#allocation2 + $0x120] sm:$0xff]
  %1893 = vrot.lane.b32.xlu0 %v1845, 96
  %v1894 = vpop.permute.xlu0 %1893
  %1895 = vrot.lane.b32.xlu0 %v1846, 96
  %v1896 = vpop.permute.xlu0 %1895
  %1897 = vrot.lane.b32.xlu0 %v1847, 96
  %v1898 = vpop.permute.xlu0 %1897
  %1899 = vrot.lane.b32.xlu0 %v1848, 96
  %v1900 = vpop.permute.xlu0 %1899
  %1901 = vrot.lane.b32.xlu0 %v1849, 96
  %v1902 = vpop.permute.xlu0 %1901
  %1903 = vrot.lane.b32.xlu0 %v1850, 96
  %v1904 = vpop.permute.xlu0 %1903
  %1905 = vrot.lane.b32.xlu0 %v1851, 96
  %v1906 = vpop.permute.xlu0 %1905
  %1907 = vrot.lane.b32.xlu0 %v1852, 96
  %v1908 = vpop.permute.xlu0 %1907
  %1909 = vrot.lane.b32.xlu0 %v1853, 96
  %v1910 = vpop.permute.xlu0 %1909
  %1911 = vrot.lane.b32.xlu0 %v1854, 96
  %v1912 = vpop.permute.xlu0 %1911
  %1913 = vrot.lane.b32.xlu0 %v1855, 96
  %v1914 = vpop.permute.xlu0 %1913
  %1915 = vrot.lane.b32.xlu0 %v1856, 96
  %v1916 = vpop.permute.xlu0 %1915
  %1917 = vrot.lane.b32.xlu0 %v1857, 96
  %v1918 = vpop.permute.xlu0 %1917
  %1919 = vrot.lane.b32.xlu0 %v1858, 96
  %v1920 = vpop.permute.xlu0 %1919
  %1921 = vrot.lane.b32.xlu0 %v1859, 96
  %v1922 = vpop.permute.xlu0 %1921
  %1923 = vrot.lane.b32.xlu0 %v1860, 96
  %v1924 = vpop.permute.xlu0 %1923
  %1925 = vrot.lane.b32.xlu0 %v1861, 96
  %v1926 = vpop.permute.xlu0 %1925
  %1927 = vrot.lane.b32.xlu0 %v1862, 96
  %v1928 = vpop.permute.xlu0 %1927
  %1929 = vrot.lane.b32.xlu0 %v1863, 96
  %v1930 = vpop.permute.xlu0 %1929
  %1931 = vrot.lane.b32.xlu0 %v1864, 96
  %v1932 = vpop.permute.xlu0 %1931
  %1933 = vrot.lane.b32.xlu0 %v1865, 96
  %v1934 = vpop.permute.xlu0 %1933
  %1935 = vrot.lane.b32.xlu0 %v1866, 96
  %v1936 = vpop.permute.xlu0 %1935
  %1937 = vrot.lane.b32.xlu0 %v1867, 96
  %v1938 = vpop.permute.xlu0 %1937
  %1939 = vrot.lane.b32.xlu0 %v1868, 96
  %v1940 = vpop.permute.xlu0 %1939
  %1965 = vst.msk [vmem:[#allocation3 + $0x8] sm:$0xff] %vm1484, %v1894
  %1966 = vst.msk [vmem:[#allocation3 + $0x20] sm:$0xff] %vm1484, %v1896
  %1967 = vst.msk [vmem:[#allocation3 + $0x38] sm:$0xff] %vm1484, %v1898
  %1968 = vst.msk [vmem:[#allocation3 + $0x50] sm:$0xff] %vm1484, %v1900
  %1969 = vst.msk [vmem:[#allocation3 + $0x68] sm:$0xff] %vm1484, %v1902
  %1970 = vst.msk [vmem:[#allocation3 + $0x80] sm:$0xff] %vm1484, %v1904
  %1971 = vst.msk [vmem:[#allocation3 + $0x98] sm:$0xff] %vm1484, %v1906
  %1972 = vst.msk [vmem:[#allocation3 + $0xb0] sm:$0xff] %vm1484, %v1908
  %1973 = vst.msk [vmem:[#allocation3 + $0xc8] sm:$0xff] %vm1484, %v1910
  %1974 = vst.msk [vmem:[#allocation3 + $0xe0] sm:$0xff] %vm1484, %v1912
  %1975 = vst.msk [vmem:[#allocation3 + $0xf8] sm:$0xff] %vm1484, %v1914
  %1976 = vst.msk [vmem:[#allocation3 + $0x110] sm:$0xff] %vm1484, %v1916
  %1977 = vst.msk [vmem:[#allocation3 + $0x128] sm:$0xff] %vm1484, %v1918
  %1978 = vst.msk [vmem:[#allocation3 + $0x140] sm:$0xff] %vm1484, %v1920
  %1979 = vst.msk [vmem:[#allocation3 + $0x158] sm:$0xff] %vm1484, %v1922
  %1980 = vst.msk [vmem:[#allocation3 + $0x170] sm:$0xff] %vm1484, %v1924
  %1981 = vst.msk [vmem:[#allocation3 + $0x188] sm:$0xff] %vm1484, %v1926
  %1982 = vst.msk [vmem:[#allocation3 + $0x1a0] sm:$0xff] %vm1484, %v1928
  %1983 = vst.msk [vmem:[#allocation3 + $0x1b8] sm:$0xff] %vm1484, %v1930
  %1984 = vst.msk [vmem:[#allocation3 + $0x1d0] sm:$0xff] %vm1484, %v1932
  %1985 = vst.msk [vmem:[#allocation3 + $0x1e8] sm:$0xff] %vm1484, %v1934
  %1986 = vst.msk [vmem:[#allocation3 + $0x200] sm:$0xff] %vm1484, %v1936
  %1987 = vst.msk [vmem:[#allocation3 + $0x218] sm:$0xff] %vm1484, %v1938
  %1988 = vst.msk [vmem:[#allocation3 + $0x230] sm:$0xff] %vm1484, %v1940
  %v1989 = vld [vmem:[#allocation2 + $0x70] sm:$0xff]
  %v1990 = vld [vmem:[#allocation2 + $0x78] sm:$0xff]
  %v1991 = vld [vmem:[#allocation2 + $0x80] sm:$0xff]
  %v1992 = vld [vmem:[#allocation2 + $0x88] sm:$0xff]
  %v1993 = vld [vmem:[#allocation2 + $0x90] sm:$0xff]
  %v1994 = vld [vmem:[#allocation2 + $0x98] sm:$0xff]
  %v1995 = vld [vmem:[#allocation2 + $0xa0] sm:$0xff]
  %v1996 = vld [vmem:[#allocation2 + $0xa8] sm:$0xff]
  %v1997 = vld [vmem:[#allocation2 + $0xb0] sm:$0xff]
  %v1998 = vld [vmem:[#allocation2 + $0xb8] sm:$0xff]
  %v1999 = vld [vmem:[#allocation2 + $0xc0] sm:$0xff]
  %v2000 = vld [vmem:[#allocation2 + $0xc8] sm:$0xff]
  %v2001 = vld [vmem:[#allocation2 + $0xd0] sm:$0xff]
  %v2002 = vld [vmem:[#allocation2 + $0xd8] sm:$0xff]
  %v2003 = vld [vmem:[#allocation2 + $0xe0] sm:$0xff]
  %v2004 = vld [vmem:[#allocation2 + $0xe8] sm:$0xff]
  %v2005 = vld [vmem:[#allocation2 + $0xf0] sm:$0xff]
  %v2006 = vld [vmem:[#allocation2 + $0xf8] sm:$0xff]
  %v2007 = vld [vmem:[#allocation2 + $0x100] sm:$0xff]
  %v2008 = vld [vmem:[#allocation2 + $0x108] sm:$0xff]
  %v2009 = vld [vmem:[#allocation2 + $0x110] sm:$0xff]
  %v2010 = vld [vmem:[#allocation2 + $0x118] sm:$0xff]
  %v2011 = vld [vmem:[#allocation2 + $0x120] sm:$0xff]
  %v2012 = vld [vmem:[#allocation2 + $0x128] sm:$0xff]
  %2013 = vst.msk [vmem:[#allocation3 + $0x10] sm:$0xff] %vm983, %v1989
  %2014 = vst.msk [vmem:[#allocation3 + $0x28] sm:$0xff] %vm983, %v1990
  %2015 = vst.msk [vmem:[#allocation3 + $0x40] sm:$0xff] %vm983, %v1991
  %2016 = vst.msk [vmem:[#allocation3 + $0x58] sm:$0xff] %vm983, %v1992
  %2017 = vst.msk [vmem:[#allocation3 + $0x70] sm:$0xff] %vm983, %v1993
  %2018 = vst.msk [vmem:[#allocation3 + $0x88] sm:$0xff] %vm983, %v1994
  %2019 = vst.msk [vmem:[#allocation3 + $0xa0] sm:$0xff] %vm983, %v1995
  %2020 = vst.msk [vmem:[#allocation3 + $0xb8] sm:$0xff] %vm983, %v1996
  %2021 = vst.msk [vmem:[#allocation3 + $0xd0] sm:$0xff] %vm983, %v1997
  %2022 = vst.msk [vmem:[#allocation3 + $0xe8] sm:$0xff] %vm983, %v1998
  %2023 = vst.msk [vmem:[#allocation3 + $0x100] sm:$0xff] %vm983, %v1999
  %2024 = vst.msk [vmem:[#allocation3 + $0x118] sm:$0xff] %vm983, %v2000
  %2025 = vst.msk [vmem:[#allocation3 + $0x130] sm:$0xff] %vm983, %v2001
  %2026 = vst.msk [vmem:[#allocation3 + $0x148] sm:$0xff] %vm983, %v2002
  %2027 = vst.msk [vmem:[#allocation3 + $0x160] sm:$0xff] %vm983, %v2003
  %2028 = vst.msk [vmem:[#allocation3 + $0x178] sm:$0xff] %vm983, %v2004
  %2029 = vst.msk [vmem:[#allocation3 + $0x190] sm:$0xff] %vm983, %v2005
  %2030 = vst.msk [vmem:[#allocation3 + $0x1a8] sm:$0xff] %vm983, %v2006
  %2031 = vst.msk [vmem:[#allocation3 + $0x1c0] sm:$0xff] %vm983, %v2007
  %2032 = vst.msk [vmem:[#allocation3 + $0x1d8] sm:$0xff] %vm983, %v2008
  %2033 = vst.msk [vmem:[#allocation3 + $0x1f0] sm:$0xff] %vm983, %v2009
  %2034 = vst.msk [vmem:[#allocation3 + $0x208] sm:$0xff] %vm983, %v2010
  %2035 = vst.msk [vmem:[#allocation3 + $0x220] sm:$0xff] %vm983, %v2011
  %2036 = vst.msk [vmem:[#allocation3 + $0x238] sm:$0xff] %vm983, %v2012
  %v2037 = vld [vmem:[#allocation3] sm:$0xff]
  %v2038 = vld [vmem:[#allocation3 + $0x8] sm:$0xff]
  %v2039 = vld [vmem:[#allocation3 + $0x10] sm:$0xff]
  %v2040 = vld [vmem:[#allocation3 + $0x18] sm:$0xff]
  %v2041 = vld [vmem:[#allocation3 + $0x20] sm:$0xff]
  %v2042 = vld [vmem:[#allocation3 + $0x28] sm:$0xff]
  %v2043 = vld [vmem:[#allocation3 + $0x30] sm:$0xff]
  %v2044 = vld [vmem:[#allocation3 + $0x38] sm:$0xff]
  %v2045 = vld [vmem:[#allocation3 + $0x40] sm:$0xff]
  %v2046 = vld [vmem:[#allocation3 + $0x48] sm:$0xff]
  %v2047 = vld [vmem:[#allocation3 + $0x50] sm:$0xff]
  %v2048 = vld [vmem:[#allocation3 + $0x58] sm:$0xff]
  %v2049 = vld [vmem:[#allocation3 + $0x60] sm:$0xff]
  %v2050 = vld [vmem:[#allocation3 + $0x68] sm:$0xff]
  %v2051 = vld [vmem:[#allocation3 + $0x70] sm:$0xff]
  %v2052 = vld [vmem:[#allocation3 + $0x78] sm:$0xff]
  %v2053 = vld [vmem:[#allocation3 + $0x80] sm:$0xff]
  %v2054 = vld [vmem:[#allocation3 + $0x88] sm:$0xff]
  %v2055 = vld [vmem:[#allocation3 + $0x90] sm:$0xff]
  %v2056 = vld [vmem:[#allocation3 + $0x98] sm:$0xff]
  %v2057 = vld [vmem:[#allocation3 + $0xa0] sm:$0xff]
  %v2058 = vld [vmem:[#allocation3 + $0xa8] sm:$0xff]
  %v2059 = vld [vmem:[#allocation3 + $0xb0] sm:$0xff]
  %v2060 = vld [vmem:[#allocation3 + $0xb8] sm:$0xff]
  %v2061 = vld [vmem:[#allocation3 + $0xc0] sm:$0xff]
  %v2062 = vld [vmem:[#allocation3 + $0xc8] sm:$0xff]
  %v2063 = vld [vmem:[#allocation3 + $0xd0] sm:$0xff]
  %v2064 = vld [vmem:[#allocation3 + $0xd8] sm:$0xff]
  %v2065 = vld [vmem:[#allocation3 + $0xe0] sm:$0xff]
  %v2066 = vld [vmem:[#allocation3 + $0xe8] sm:$0xff]
  %v2067 = vld [vmem:[#allocation3 + $0xf0] sm:$0xff]
  %v2068 = vld [vmem:[#allocation3 + $0xf8] sm:$0xff]
  %v2069 = vld [vmem:[#allocation3 + $0x100] sm:$0xff]
  %v2070 = vld [vmem:[#allocation3 + $0x108] sm:$0xff]
  %v2071 = vld [vmem:[#allocation3 + $0x110] sm:$0xff]
  %v2072 = vld [vmem:[#allocation3 + $0x118] sm:$0xff]
  %v2073 = vld [vmem:[#allocation3 + $0x120] sm:$0xff]
  %v2074 = vld [vmem:[#allocation3 + $0x128] sm:$0xff]
  %v2075 = vld [vmem:[#allocation3 + $0x130] sm:$0xff]
  %v2076 = vld [vmem:[#allocation3 + $0x138] sm:$0xff]
  %v2077 = vld [vmem:[#allocation3 + $0x140] sm:$0xff]
  %v2078 = vld [vmem:[#allocation3 + $0x148] sm:$0xff]
  %v2079 = vld [vmem:[#allocation3 + $0x150] sm:$0xff]
  %v2080 = vld [vmem:[#allocation3 + $0x158] sm:$0xff]
  %v2081 = vld [vmem:[#allocation3 + $0x160] sm:$0xff]
  %v2082 = vld [vmem:[#allocation3 + $0x168] sm:$0xff]
  %v2083 = vld [vmem:[#allocation3 + $0x170] sm:$0xff]
  %v2084 = vld [vmem:[#allocation3 + $0x178] sm:$0xff]
  %v2085 = vld [vmem:[#allocation3 + $0x180] sm:$0xff]
  %v2086 = vld [vmem:[#allocation3 + $0x188] sm:$0xff]
  %v2087 = vld [vmem:[#allocation3 + $0x190] sm:$0xff]
  %v2088 = vld [vmem:[#allocation3 + $0x198] sm:$0xff]
  %v2089 = vld [vmem:[#allocation3 + $0x1a0] sm:$0xff]
  %v2090 = vld [vmem:[#allocation3 + $0x1a8] sm:$0xff]
  %v2091 = vld [vmem:[#allocation3 + $0x1b0] sm:$0xff]
  %v2092 = vld [vmem:[#allocation3 + $0x1b8] sm:$0xff]
  %v2093 = vld [vmem:[#allocation3 + $0x1c0] sm:$0xff]
  %v2094 = vld [vmem:[#allocation3 + $0x1c8] sm:$0xff]
  %v2095 = vld [vmem:[#allocation3 + $0x1d0] sm:$0xff]
  %v2096 = vld [vmem:[#allocation3 + $0x1d8] sm:$0xff]
  %v2097 = vld [vmem:[#allocation3 + $0x1e0] sm:$0xff]
  %v2098 = vld [vmem:[#allocation3 + $0x1e8] sm:$0xff]
  %v2099 = vld [vmem:[#allocation3 + $0x1f0] sm:$0xff]
  %v2100 = vld [vmem:[#allocation3 + $0x1f8] sm:$0xff]
  %v2101 = vld [vmem:[#allocation3 + $0x200] sm:$0xff]
  %v2102 = vld [vmem:[#allocation3 + $0x208] sm:$0xff]
  %v2103 = vld [vmem:[#allocation3 + $0x210] sm:$0xff]
  %v2104 = vld [vmem:[#allocation3 + $0x218] sm:$0xff]
  %v2105 = vld [vmem:[#allocation3 + $0x220] sm:$0xff]
  %v2106 = vld [vmem:[#allocation3 + $0x228] sm:$0xff]
  %v2107 = vld [vmem:[#allocation3 + $0x230] sm:$0xff]
  %v2108 = vld [vmem:[#allocation3 + $0x238] sm:$0xff]
  %v2109 = vld [vmem:[%s3] sm:$0xff]
  %v2110 = vld [vmem:[%s3 + $0x8] sm:$0xff]
  %v2111 = vld [vmem:[%s3 + $0x10] sm:$0xff]
  %v2112 = vld [vmem:[%s3 + $0x18] sm:$0xff]
  %v2113 = vld [vmem:[%s3 + $0x20] sm:$0xff]
  %v2114 = vld [vmem:[%s3 + $0x28] sm:$0xff]
  %v2115 = vld [vmem:[%s3 + $0x30] sm:$0xff]
  %v2116 = vld [vmem:[%s3 + $0x38] sm:$0xff]
  %v2117 = vld [vmem:[%s3 + $0x40] sm:$0xff]
  %v2118 = vld [vmem:[%s3 + $0x48] sm:$0xff]
  %v2119 = vld [vmem:[%s3 + $0x50] sm:$0xff]
  %v2120 = vld [vmem:[%s3 + $0x58] sm:$0xff]
  %v2121 = vld [vmem:[%s3 + $0x60] sm:$0xff]
  %v2122 = vld [vmem:[%s3 + $0x68] sm:$0xff]
  %v2123 = vld [vmem:[%s3 + $0x70] sm:$0xff]
  %v2124 = vld [vmem:[%s3 + $0x78] sm:$0xff]
  %v2125 = vld [vmem:[%s3 + $0x80] sm:$0xff]
  %v2126 = vld [vmem:[%s3 + $0x88] sm:$0xff]
  %v2127 = vld [vmem:[%s3 + $0x90] sm:$0xff]
  %v2128 = vld [vmem:[%s3 + $0x98] sm:$0xff]
  %v2129 = vld [vmem:[%s3 + $0xa0] sm:$0xff]
  %v2130 = vld [vmem:[%s3 + $0xa8] sm:$0xff]
  %v2131 = vld [vmem:[%s3 + $0xb0] sm:$0xff]
  %v2132 = vld [vmem:[%s3 + $0xb8] sm:$0xff]
  %v2133 = vld [vmem:[%s3 + $0xc0] sm:$0xff]
  %v2134 = vld [vmem:[%s3 + $0xc8] sm:$0xff]
  %v2135 = vld [vmem:[%s3 + $0xd0] sm:$0xff]
  %v2136 = vld [vmem:[%s3 + $0xd8] sm:$0xff]
  %v2137 = vld [vmem:[%s3 + $0xe0] sm:$0xff]
  %v2138 = vld [vmem:[%s3 + $0xe8] sm:$0xff]
  %v2139 = vld [vmem:[%s3 + $0xf0] sm:$0xff]
  %v2140 = vld [vmem:[%s3 + $0xf8] sm:$0xff]
  %v2141 = vld [vmem:[%s3 + $0x100] sm:$0xff]
  %v2142 = vld [vmem:[%s3 + $0x108] sm:$0xff]
  %v2143 = vld [vmem:[%s3 + $0x110] sm:$0xff]
  %v2144 = vld [vmem:[%s3 + $0x118] sm:$0xff]
  %v2146 = vsel %vm983, %v2039, 0
  %v2149 = vsel %vm983, %v2042, 0
  %v2152 = vsel %vm983, %v2045, 0
  %v2155 = vsel %vm983, %v2048, 0
  %v2158 = vsel %vm983, %v2051, 0
  %v2161 = vsel %vm983, %v2054, 0
  %v2164 = vsel %vm983, %v2057, 0
  %v2167 = vsel %vm983, %v2060, 0
  %v2170 = vsel %vm983, %v2063, 0
  %v2173 = vsel %vm983, %v2066, 0
  %v2176 = vsel %vm983, %v2069, 0
  %v2179 = vsel %vm983, %v2072, 0
  %v2182 = vsel %vm983, %v2075, 0
  %v2185 = vsel %vm983, %v2078, 0
  %v2188 = vsel %vm983, %v2081, 0
  %v2191 = vsel %vm983, %v2084, 0
  %v2194 = vsel %vm983, %v2087, 0
  %v2197 = vsel %vm983, %v2090, 0
  %v2200 = vsel %vm983, %v2093, 0
  %v2203 = vsel %vm983, %v2096, 0
  %v2206 = vsel %vm983, %v2099, 0
  %v2209 = vsel %vm983, %v2102, 0
  %v2212 = vsel %vm983, %v2105, 0
  %v2215 = vsel %vm983, %v2108, 0
  %2217 = vmatprep.subr.mxu0 0.0
  %2218 = vmatpush1.msra.mxu0 %v2109
  %2219 = vmatprep.subr.mxu0 0.0
  %2220 = vmatpush1.msra.mxu0 %v2110
  %2221 = vmatprep.subr.mxu0 0.0
  %2222 = vmatpush1.msra.mxu0 %v2111
  %2223 = vmatprep.subr.mxu0 0.0
  %2224 = vmatpush1.msra.mxu0 %v2112
  %2225 = vmatprep.subr.mxu0 0.0
  %2226 = vmatpush1.msra.mxu0 %v2113
  %2227 = vmatprep.subr.mxu0 0.0
  %2228 = vmatpush1.msra.mxu0 %v2114
  %2229 = vmatprep.subr.mxu0 0.0
  %2230 = vmatpush1.msra.mxu0 %v2115
  %2231 = vmatprep.subr.mxu0 0.0
  %2232 = vmatpush1.msra.mxu0 %v2116
  %2233 = vmatprep.subr.mxu0 0.0
  %2234 = vmatpush1.msra.mxu0 %v2117
  %2235 = vmatprep.subr.mxu0 0.0
  %2236 = vmatpush1.msra.mxu0 %v2118
  %2237 = vmatprep.subr.mxu0 0.0
  %2238 = vmatpush1.msra.mxu0 %v2119
  %2239 = vmatprep.subr.mxu0 0.0
  %2240 = vmatpush1.msra.mxu0 %v2120
  %2241 = vmatprep.subr.mxu0 0.0
  %2242 = vmatpush1.msra.mxu0 %v2121
  %2243 = vmatprep.subr.mxu0 0.0
  %2244 = vmatpush1.msra.mxu0 %v2122
  %2245 = vmatprep.subr.mxu0 0.0
  %2246 = vmatpush1.msra.mxu0 %v2123
  %2247 = vmatprep.subr.mxu0 0.0
  %2248 = vmatpush1.msra.mxu0 %v2124
  %2249 = vmatprep.subr.mxu0 0.0
  %2250 = vmatpush1.msra.mxu0 %v2125
  %2251 = vmatprep.subr.mxu0 0.0
  %2252 = vmatpush1.msra.mxu0 %v2126
  %2253 = vmatprep.subr.mxu0 0.0
  %2254 = vmatpush1.msra.mxu0 %v2127
  %2255 = vmatprep.subr.mxu0 0.0
  %2256 = vmatpush1.msra.mxu0 %v2128
  %2257 = vmatprep.subr.mxu0 0.0
  %2258 = vmatpush1.msra.mxu0 %v2129
  %2259 = vmatprep.subr.mxu0 0.0
  %2260 = vmatpush1.msra.mxu0 %v2130
  %2261 = vmatprep.subr.mxu0 0.0
  %2262 = vmatpush1.msra.mxu0 %v2131
  %2263 = vmatprep.subr.mxu0 0.0
  %2264 = vmatpush1.msra.mxu0 %v2132
  %2265 = vmatprep.subr.mxu0 0.0
  %2266 = vmatpush1.msra.mxu0 %v2133
  %2267 = vmatprep.subr.mxu0 0.0
  %2268 = vmatpush1.msra.mxu0 %v2134
  %2269 = vmatprep.subr.mxu0 0.0
  %2270 = vmatpush1.msra.mxu0 %v2135
  %2271 = vmatprep.subr.mxu0 0.0
  %2272 = vmatpush1.msra.mxu0 %v2136
  %2273 = vmatprep.subr.mxu0 0.0
  %2274 = vmatpush1.msra.mxu0 %v2137
  %2275 = vmatprep.subr.mxu0 0.0
  %2276 = vmatpush1.msra.mxu0 %v2138
  %2277 = vmatprep.subr.mxu0 0.0
  %2278 = vmatpush1.msra.mxu0 %v2139
  %2279 = vmatprep.subr.mxu0 0.0
  %2280 = vmatpush1.msra.mxu0 %v2140
  %2281 = vmatprep.mubr.f32.mxu0 %v2038
  %2282 = vmatmul.mubr.f32.gmra.mrb[0].mxu0 %v2037
  %v2283 = vpop.f32.mrb[0].mxu0
  %v2284 = vadd.f32 0.0, %v2283
  %v2285 = vpop.f32.mrb[0].mxu0
  %2286 = vmatprep.mubr.f32.mxu0 %v2041
  %2287 = vmatmul.mubr.f32.gmra.mrb[0].mxu0 %v2040
  %v2288 = vpop.f32.mrb[0].mxu0
  %v2289 = vadd.f32 0.0, %v2288
  %v2290 = vpop.f32.mrb[0].mxu0
  %2291 = vmatprep.mubr.f32.mxu0 %v2044
  %2292 = vmatmul.mubr.f32.gmra.mrb[0].mxu0 %v2043
  %v2293 = vpop.f32.mrb[0].mxu0
  %v2294 = vadd.f32 0.0, %v2293
  %v2295 = vpop.f32.mrb[0].mxu0
  %2296 = vmatprep.mubr.f32.mxu0 %v2047
  %2297 = vmatmul.mubr.f32.gmra.mrb[0].mxu0 %v2046
  %v2298 = vpop.f32.mrb[0].mxu0
  %v2299 = vadd.f32 0.0, %v2298
  %v2300 = vpop.f32.mrb[0].mxu0
  %2301 = vmatprep.mubr.f32.mxu0 %v2050
  %2302 = vmatmul.mubr.f32.gmra.mrb[0].mxu0 %v2049
  %v2303 = vpop.f32.mrb[0].mxu0
  %v2304 = vadd.f32 0.0, %v2303
  %v2305 = vpop.f32.mrb[0].mxu0
  %2306 = vmatprep.mubr.f32.mxu0 %v2053
  %2307 = vmatmul.mubr.f32.gmra.mrb[0].mxu0 %v2052
  %v2308 = vpop.f32.mrb[0].mxu0
  %v2309 = vadd.f32 0.0, %v2308
  %v2310 = vpop.f32.mrb[0].mxu0
  %2311 = vmatprep.mubr.f32.mxu0 %v2056
  %2312 = vmatmul.mubr.f32.gmra.mrb[0].mxu0 %v2055
  %v2313 = vpop.f32.mrb[0].mxu0
  %v2314 = vadd.f32 0.0, %v2313
  %v2315 = vpop.f32.mrb[0].mxu0
  %2316 = vmatprep.mubr.f32.mxu0 %v2059
  %2317 = vmatmul.mubr.f32.gmra.mrb[0].mxu0 %v2058
  %v2318 = vpop.f32.mrb[0].mxu0
  %v2319 = vadd.f32 0.0, %v2318
  %v2320 = vpop.f32.mrb[0].mxu0
  %2321 = vmatprep.mubr.f32.mxu0 %v2062
  %2322 = vmatmul.mubr.f32.gmra.mrb[0].mxu0 %v2061
  %v2323 = vpop.f32.mrb[0].mxu0
  %v2324 = vadd.f32 0.0, %v2323
  %v2325 = vpop.f32.mrb[0].mxu0
  %2326 = vmatprep.mubr.f32.mxu0 %v2065
  %2327 = vmatmul.mubr.f32.gmra.mrb[0].mxu0 %v2064
  %v2328 = vpop.f32.mrb[0].mxu0
  %v2329 = vadd.f32 0.0, %v2328
  %v2330 = vpop.f32.mrb[0].mxu0
  %2331 = vmatprep.mubr.f32.mxu0 %v2068
  %2332 = vmatmul.mubr.f32.gmra.mrb[0].mxu0 %v2067
  %v2333 = vpop.f32.mrb[0].mxu0
  %v2334 = vadd.f32 0.0, %v2333
  %v2335 = vpop.f32.mrb[0].mxu0
  %2336 = vmatprep.mubr.f32.mxu0 %v2071
  %2337 = vmatmul.mubr.f32.gmra.mrb[0].mxu0 %v2070
  %v2338 = vpop.f32.mrb[0].mxu0
  %v2339 = vadd.f32 0.0, %v2338
  %v2340 = vpop.f32.mrb[0].mxu0
  %2341 = vmatprep.mubr.f32.mxu0 %v2074
  %2342 = vmatmul.mubr.f32.gmra.mrb[0].mxu0 %v2073
  %v2343 = vpop.f32.mrb[0].mxu0
  %v2344 = vadd.f32 0.0, %v2343
  %v2345 = vpop.f32.mrb[0].mxu0
  %2346 = vmatprep.mubr.f32.mxu0 %v2077
  %2347 = vmatmul.mubr.f32.gmra.mrb[0].mxu0 %v2076
  %v2348 = vpop.f32.mrb[0].mxu0
  %v2349 = vadd.f32 0.0, %v2348
  %v2350 = vpop.f32.mrb[0].mxu0
  %2351 = vmatprep.mubr.f32.mxu0 %v2080
  %2352 = vmatmul.mubr.f32.gmra.mrb[0].mxu0 %v2079
  %v2353 = vpop.f32.mrb[0].mxu0
  %v2354 = vadd.f32 0.0, %v2353
  %v2355 = vpop.f32.mrb[0].mxu0
  %2356 = vmatprep.mubr.f32.mxu0 %v2083
  %2357 = vmatmul.mubr.f32.gmra.mrb[0].mxu0 %v2082
  %v2358 = vpop.f32.mrb[0].mxu0
  %v2359 = vadd.f32 0.0, %v2358
  %v2360 = vpop.f32.mrb[0].mxu0
  %2361 = vmatprep.mubr.f32.mxu0 %v2086
  %2362 = vmatmul.mubr.f32.gmra.mrb[0].mxu0 %v2085
  %v2363 = vpop.f32.mrb[0].mxu0
  %v2364 = vadd.f32 0.0, %v2363
  %v2365 = vpop.f32.mrb[0].mxu0
  %2366 = vmatprep.mubr.f32.mxu0 %v2089
  %2367 = vmatmul.mubr.f32.gmra.mrb[0].mxu0 %v2088
  %v2368 = vpop.f32.mrb[0].mxu0
  %v2369 = vadd.f32 0.0, %v2368
  %v2370 = vpop.f32.mrb[0].mxu0
  %2371 = vmatprep.mubr.f32.mxu0 %v2092
  %2372 = vmatmul.mubr.f32.gmra.mrb[0].mxu0 %v2091
  %v2373 = vpop.f32.mrb[0].mxu0
  %v2374 = vadd.f32 0.0, %v2373
  %v2375 = vpop.f32.mrb[0].mxu0
  %2376 = vmatprep.mubr.f32.mxu0 %v2095
  %2377 = vmatmul.mubr.f32.gmra.mrb[0].mxu0 %v2094
  %v2378 = vpop.f32.mrb[0].mxu0
  %v2379 = vadd.f32 0.0, %v2378
  %v2380 = vpop.f32.mrb[0].mxu0
  %2381 = vmatprep.mubr.f32.mxu0 %v2098
  %2382 = vmatmul.mubr.f32.gmra.mrb[0].mxu0 %v2097
  %v2383 = vpop.f32.mrb[0].mxu0
  %v2384 = vadd.f32 0.0, %v2383
  %v2385 = vpop.f32.mrb[0].mxu0
  %2386 = vmatprep.mubr.f32.mxu0 %v2101
  %2387 = vmatmul.mubr.f32.gmra.mrb[0].mxu0 %v2100
  %v2388 = vpop.f32.mrb[0].mxu0
  %v2389 = vadd.f32 0.0, %v2388
  %v2390 = vpop.f32.mrb[0].mxu0
  %2391 = vmatprep.mubr.f32.mxu0 %v2104
  %2392 = vmatmul.mubr.f32.gmra.mrb[0].mxu0 %v2103
  %v2393 = vpop.f32.mrb[0].mxu0
  %v2394 = vadd.f32 0.0, %v2393
  %v2395 = vpop.f32.mrb[0].mxu0
  %2396 = vmatprep.mubr.f32.mxu0 %v2107
  %2397 = vmatmul.mubr.f32.gmra.mrb[0].mxu0 %v2106
  %v2398 = vpop.f32.mrb[0].mxu0
  %v2399 = vadd.f32 0.0, %v2398
  %v2400 = vpop.f32.mrb[0].mxu0
  %2401 = vdwg.mxu0
  %2402 = vmatprep.subr.mxu0 0.0
  %2403 = vmatpush1.msra.mxu0 %v2141
  %2404 = vmatprep.subr.mxu0 0.0
  %2405 = vmatpush1.msra.mxu0 %v2142
  %2406 = vmatprep.subr.mxu0 0.0
  %2407 = vmatpush1.msra.mxu0 %v2143
  %2408 = vmatprep.subr.mxu0 0.0
  %2409 = vmatpush1.msra.mxu0 %v2144
  %2410 = vmatprep.subr.mxu0 0.0
  %2411 = vmatpush1.msra.mxu0 0.0
  %2412 = vmatprep.subr.mxu0 0.0
  %2413 = vmatpush1.msra.mxu0 0.0
  %2414 = vmatprep.subr.mxu0 0.0
  %2415 = vmatpush1.msra.mxu0 0.0
  %2416 = vmatprep.subr.mxu0 0.0
  %2417 = vmatpush1.msra.mxu0 0.0
  %2418 = vmatprep.subr.mxu0 0.0
  %2419 = vmatpush1.msra.mxu0 0.0
  %2420 = vmatprep.subr.mxu0 0.0
  %2421 = vmatpush1.msra.mxu0 0.0
  %2422 = vmatprep.subr.mxu0 0.0
  %2423 = vmatpush1.msra.mxu0 0.0
  %2424 = vmatprep.subr.mxu0 0.0
  %2425 = vmatpush1.msra.mxu0 0.0
  %2426 = vmatprep.subr.mxu0 0.0
  %2427 = vmatpush1.msra.mxu0 0.0
  %2428 = vmatprep.subr.mxu0 0.0
  %2429 = vmatpush1.msra.mxu0 0.0
  %2430 = vmatprep.subr.mxu0 0.0
  %2431 = vmatpush1.msra.mxu0 0.0
  %2432 = vmatprep.subr.mxu0 0.0
  %2433 = vmatpush1.msra.mxu0 0.0
  %2434 = vmatprep.subr.mxu0 0.0
  %2435 = vmatpush1.msra.mxu0 0.0
  %2436 = vmatprep.subr.mxu0 0.0
  %2437 = vmatpush1.msra.mxu0 0.0
  %2438 = vmatprep.subr.mxu0 0.0
  %2439 = vmatpush1.msra.mxu0 0.0
  %2440 = vmatprep.subr.mxu0 0.0
  %2441 = vmatpush1.msra.mxu0 0.0
  %2442 = vmatprep.subr.mxu0 0.0
  %2443 = vmatpush1.msra.mxu0 0.0
  %2444 = vmatprep.subr.mxu0 0.0
  %2445 = vmatpush1.msra.mxu0 0.0
  %2446 = vmatprep.subr.mxu0 0.0
  %2447 = vmatpush1.msra.mxu0 0.0
  %2448 = vmatprep.subr.mxu0 0.0
  %2449 = vmatpush1.msra.mxu0 0.0
  %2450 = vmatprep.subr.mxu0 0.0
  %2451 = vmatpush1.msra.mxu0 0.0
  %2452 = vmatprep.subr.mxu0 0.0
  %2453 = vmatpush1.msra.mxu0 0.0
  %2454 = vmatprep.subr.mxu0 0.0
  %2455 = vmatpush1.msra.mxu0 0.0
  %2456 = vmatprep.subr.mxu0 0.0
  %2457 = vmatpush1.msra.mxu0 0.0
  %2458 = vmatprep.subr.mxu0 0.0
  %2459 = vmatpush1.msra.mxu0 0.0
  %2460 = vmatprep.subr.mxu0 0.0
  %2461 = vmatpush1.msra.mxu0 0.0
  %2462 = vmatprep.subr.mxu0 0.0
  %2463 = vmatpush1.msra.mxu0 0.0
  %2464 = vmatprep.subr.mxu0 0.0
  %2465 = vmatpush1.msra.mxu0 0.0
  %2466 = vmatprep.mubr.f32.mxu0 0.0
  %2467 = vmatmul.mubr.f32.gmra.mrb[0].mxu0 %v2146
  %v2468 = vpop.f32.mrb[0].mxu0
  %v2469 = vadd.f32 %v2284, %v2468
  %v2470 = vpop.f32.mrb[0].mxu0
  %2471 = vmatprep.mubr.f32.mxu0 0.0
  %2472 = vmatmul.mubr.f32.gmra.mrb[0].mxu0 %v2149
  %v2473 = vpop.f32.mrb[0].mxu0
  %v2474 = vadd.f32 %v2289, %v2473
  %v2475 = vpop.f32.mrb[0].mxu0
  %2476 = vmatprep.mubr.f32.mxu0 0.0
  %2477 = vmatmul.mubr.f32.gmra.mrb[0].mxu0 %v2152
  %v2478 = vpop.f32.mrb[0].mxu0
  %v2479 = vadd.f32 %v2294, %v2478
  %v2480 = vpop.f32.mrb[0].mxu0
  %2481 = vmatprep.mubr.f32.mxu0 0.0
  %2482 = vmatmul.mubr.f32.gmra.mrb[0].mxu0 %v2155
  %v2483 = vpop.f32.mrb[0].mxu0
  %v2484 = vadd.f32 %v2299, %v2483
  %v2485 = vpop.f32.mrb[0].mxu0
  %2486 = vmatprep.mubr.f32.mxu0 0.0
  %2487 = vmatmul.mubr.f32.gmra.mrb[0].mxu0 %v2158
  %v2488 = vpop.f32.mrb[0].mxu0
  %v2489 = vadd.f32 %v2304, %v2488
  %v2490 = vpop.f32.mrb[0].mxu0
  %2491 = vmatprep.mubr.f32.mxu0 0.0
  %2492 = vmatmul.mubr.f32.gmra.mrb[0].mxu0 %v2161
  %v2493 = vpop.f32.mrb[0].mxu0
  %v2494 = vadd.f32 %v2309, %v2493
  %v2495 = vpop.f32.mrb[0].mxu0
  %2496 = vmatprep.mubr.f32.mxu0 0.0
  %2497 = vmatmul.mubr.f32.gmra.mrb[0].mxu0 %v2164
  %v2498 = vpop.f32.mrb[0].mxu0
  %v2499 = vadd.f32 %v2314, %v2498
  %v2500 = vpop.f32.mrb[0].mxu0
  %2501 = vmatprep.mubr.f32.mxu0 0.0
  %2502 = vmatmul.mubr.f32.gmra.mrb[0].mxu0 %v2167
  %v2503 = vpop.f32.mrb[0].mxu0
  %v2504 = vadd.f32 %v2319, %v2503
  %v2505 = vpop.f32.mrb[0].mxu0
  %2506 = vmatprep.mubr.f32.mxu0 0.0
  %2507 = vmatmul.mubr.f32.gmra.mrb[0].mxu0 %v2170
  %v2508 = vpop.f32.mrb[0].mxu0
  %v2509 = vadd.f32 %v2324, %v2508
  %v2510 = vpop.f32.mrb[0].mxu0
  %2511 = vmatprep.mubr.f32.mxu0 0.0
  %2512 = vmatmul.mubr.f32.gmra.mrb[0].mxu0 %v2173
  %v2513 = vpop.f32.mrb[0].mxu0
  %v2514 = vadd.f32 %v2329, %v2513
  %v2515 = vpop.f32.mrb[0].mxu0
  %2516 = vmatprep.mubr.f32.mxu0 0.0
  %2517 = vmatmul.mubr.f32.gmra.mrb[0].mxu0 %v2176
  %v2518 = vpop.f32.mrb[0].mxu0
  %v2519 = vadd.f32 %v2334, %v2518
  %v2520 = vpop.f32.mrb[0].mxu0
  %2521 = vmatprep.mubr.f32.mxu0 0.0
  %2522 = vmatmul.mubr.f32.gmra.mrb[0].mxu0 %v2179
  %v2523 = vpop.f32.mrb[0].mxu0
  %v2524 = vadd.f32 %v2339, %v2523
  %v2525 = vpop.f32.mrb[0].mxu0
  %2526 = vmatprep.mubr.f32.mxu0 0.0
  %2527 = vmatmul.mubr.f32.gmra.mrb[0].mxu0 %v2182
  %v2528 = vpop.f32.mrb[0].mxu0
  %v2529 = vadd.f32 %v2344, %v2528
  %v2530 = vpop.f32.mrb[0].mxu0
  %2531 = vmatprep.mubr.f32.mxu0 0.0
  %2532 = vmatmul.mubr.f32.gmra.mrb[0].mxu0 %v2185
  %v2533 = vpop.f32.mrb[0].mxu0
  %v2534 = vadd.f32 %v2349, %v2533
  %v2535 = vpop.f32.mrb[0].mxu0
  %2536 = vmatprep.mubr.f32.mxu0 0.0
  %2537 = vmatmul.mubr.f32.gmra.mrb[0].mxu0 %v2188
  %v2538 = vpop.f32.mrb[0].mxu0
  %v2539 = vadd.f32 %v2354, %v2538
  %v2540 = vpop.f32.mrb[0].mxu0
  %2541 = vmatprep.mubr.f32.mxu0 0.0
  %2542 = vmatmul.mubr.f32.gmra.mrb[0].mxu0 %v2191
  %v2543 = vpop.f32.mrb[0].mxu0
  %v2544 = vadd.f32 %v2359, %v2543
  %v2545 = vpop.f32.mrb[0].mxu0
  %2546 = vmatprep.mubr.f32.mxu0 0.0
  %2547 = vmatmul.mubr.f32.gmra.mrb[0].mxu0 %v2194
  %v2548 = vpop.f32.mrb[0].mxu0
  %v2549 = vadd.f32 %v2364, %v2548
  %v2550 = vpop.f32.mrb[0].mxu0
  %2551 = vmatprep.mubr.f32.mxu0 0.0
  %2552 = vmatmul.mubr.f32.gmra.mrb[0].mxu0 %v2197
  %v2553 = vpop.f32.mrb[0].mxu0
  %v2554 = vadd.f32 %v2369, %v2553
  %v2555 = vpop.f32.mrb[0].mxu0
  %2556 = vmatprep.mubr.f32.mxu0 0.0
  %2557 = vmatmul.mubr.f32.gmra.mrb[0].mxu0 %v2200
  %v2558 = vpop.f32.mrb[0].mxu0
  %v2559 = vadd.f32 %v2374, %v2558
  %v2560 = vpop.f32.mrb[0].mxu0
  %2561 = vmatprep.mubr.f32.mxu0 0.0
  %2562 = vmatmul.mubr.f32.gmra.mrb[0].mxu0 %v2203
  %v2563 = vpop.f32.mrb[0].mxu0
  %v2564 = vadd.f32 %v2379, %v2563
  %v2565 = vpop.f32.mrb[0].mxu0
  %2566 = vmatprep.mubr.f32.mxu0 0.0
  %2567 = vmatmul.mubr.f32.gmra.mrb[0].mxu0 %v2206
  %v2568 = vpop.f32.mrb[0].mxu0
  %v2569 = vadd.f32 %v2384, %v2568
  %v2570 = vpop.f32.mrb[0].mxu0
  %2571 = vmatprep.mubr.f32.mxu0 0.0
  %2572 = vmatmul.mubr.f32.gmra.mrb[0].mxu0 %v2209
  %v2573 = vpop.f32.mrb[0].mxu0
  %v2574 = vadd.f32 %v2389, %v2573
  %v2575 = vpop.f32.mrb[0].mxu0
  %2576 = vmatprep.mubr.f32.mxu0 0.0
  %2577 = vmatmul.mubr.f32.gmra.mrb[0].mxu0 %v2212
  %v2578 = vpop.f32.mrb[0].mxu0
  %v2579 = vadd.f32 %v2394, %v2578
  %v2580 = vpop.f32.mrb[0].mxu0
  %2581 = vmatprep.mubr.f32.mxu0 0.0
  %2582 = vmatmul.mubr.f32.gmra.mrb[0].mxu0 %v2215
  %v2583 = vpop.f32.mrb[0].mxu0
  %v2584 = vadd.f32 %v2399, %v2583
  %v2585 = vpop.f32.mrb[0].mxu0
  %2586 = vdwg.mxu0
  %2611 = vrot.lane.b32.xlu0 %v2469, 64
  %v2612 = vpop.permute.xlu0 %2611
  %2613 = vrot.lane.b32.xlu0 %v2474, 64
  %v2614 = vpop.permute.xlu0 %2613
  %2615 = vrot.lane.b32.xlu0 %v2479, 64
  %v2616 = vpop.permute.xlu0 %2615
  %2617 = vrot.lane.b32.xlu0 %v2484, 64
  %v2618 = vpop.permute.xlu0 %2617
  %2619 = vrot.lane.b32.xlu0 %v2489, 64
  %v2620 = vpop.permute.xlu0 %2619
  %2621 = vrot.lane.b32.xlu0 %v2494, 64
  %v2622 = vpop.permute.xlu0 %2621
  %2623 = vrot.lane.b32.xlu0 %v2499, 64
  %v2624 = vpop.permute.xlu0 %2623
  %2625 = vrot.lane.b32.xlu0 %v2504, 64
  %v2626 = vpop.permute.xlu0 %2625
  %2627 = vrot.lane.b32.xlu0 %v2509, 64
  %v2628 = vpop.permute.xlu0 %2627
  %2629 = vrot.lane.b32.xlu0 %v2514, 64
  %v2630 = vpop.permute.xlu0 %2629
  %2631 = vrot.lane.b32.xlu0 %v2519, 64
  %v2632 = vpop.permute.xlu0 %2631
  %2633 = vrot.lane.b32.xlu0 %v2524, 64
  %v2634 = vpop.permute.xlu0 %2633
  %2635 = vrot.lane.b32.xlu0 %v2529, 64
  %v2636 = vpop.permute.xlu0 %2635
  %2637 = vrot.lane.b32.xlu0 %v2534, 64
  %v2638 = vpop.permute.xlu0 %2637
  %2639 = vrot.lane.b32.xlu0 %v2539, 64
  %v2640 = vpop.permute.xlu0 %2639
  %2641 = vrot.lane.b32.xlu0 %v2544, 64
  %v2642 = vpop.permute.xlu0 %2641
  %2643 = vrot.lane.b32.xlu0 %v2549, 64
  %v2644 = vpop.permute.xlu0 %2643
  %2645 = vrot.lane.b32.xlu0 %v2554, 64
  %v2646 = vpop.permute.xlu0 %2645
  %2647 = vrot.lane.b32.xlu0 %v2559, 64
  %v2648 = vpop.permute.xlu0 %2647
  %2649 = vrot.lane.b32.xlu0 %v2564, 64
  %v2650 = vpop.permute.xlu0 %2649
  %2651 = vrot.lane.b32.xlu0 %v2569, 64
  %v2652 = vpop.permute.xlu0 %2651
  %2653 = vrot.lane.b32.xlu0 %v2574, 64
  %v2654 = vpop.permute.xlu0 %2653
  %2655 = vrot.lane.b32.xlu0 %v2579, 64
  %v2656 = vpop.permute.xlu0 %2655
  %2657 = vrot.lane.b32.xlu0 %v2584, 64
  %v2658 = vpop.permute.xlu0 %2657
  %v2683 = vmax.f32 %v2469, %v2612
  %v2684 = vmax.f32 %v2474, %v2614
  %v2685 = vmax.f32 %v2479, %v2616
  %v2686 = vmax.f32 %v2484, %v2618
  %v2687 = vmax.f32 %v2489, %v2620
  %v2688 = vmax.f32 %v2494, %v2622
  %v2689 = vmax.f32 %v2499, %v2624
  %v2690 = vmax.f32 %v2504, %v2626
  %v2691 = vmax.f32 %v2509, %v2628
  %v2692 = vmax.f32 %v2514, %v2630
  %v2693 = vmax.f32 %v2519, %v2632
  %v2694 = vmax.f32 %v2524, %v2634
  %v2695 = vmax.f32 %v2529, %v2636
  %v2696 = vmax.f32 %v2534, %v2638
  %v2697 = vmax.f32 %v2539, %v2640
  %v2698 = vmax.f32 %v2544, %v2642
  %v2699 = vmax.f32 %v2549, %v2644
  %v2700 = vmax.f32 %v2554, %v2646
  %v2701 = vmax.f32 %v2559, %v2648
  %v2702 = vmax.f32 %v2564, %v2650
  %v2703 = vmax.f32 %v2569, %v2652
  %v2704 = vmax.f32 %v2574, %v2654
  %v2705 = vmax.f32 %v2579, %v2656
  %v2706 = vmax.f32 %v2584, %v2658
  %2731 = vrot.lane.b32.xlu0 %v2683, 96
  %v2732 = vpop.permute.xlu0 %2731
  %2733 = vrot.lane.b32.xlu0 %v2684, 96
  %v2734 = vpop.permute.xlu0 %2733
  %2735 = vrot.lane.b32.xlu0 %v2685, 96
  %v2736 = vpop.permute.xlu0 %2735
  %2737 = vrot.lane.b32.xlu0 %v2686, 96
  %v2738 = vpop.permute.xlu0 %2737
  %2739 = vrot.lane.b32.xlu0 %v2687, 96
  %v2740 = vpop.permute.xlu0 %2739
  %2741 = vrot.lane.b32.xlu0 %v2688, 96
  %v2742 = vpop.permute.xlu0 %2741
  %2743 = vrot.lane.b32.xlu0 %v2689, 96
  %v2744 = vpop.permute.xlu0 %2743
  %2745 = vrot.lane.b32.xlu0 %v2690, 96
  %v2746 = vpop.permute.xlu0 %2745
  %2747 = vrot.lane.b32.xlu0 %v2691, 96
  %v2748 = vpop.permute.xlu0 %2747
  %2749 = vrot.lane.b32.xlu0 %v2692, 96
  %v2750 = vpop.permute.xlu0 %2749
  %2751 = vrot.lane.b32.xlu0 %v2693, 96
  %v2752 = vpop.permute.xlu0 %2751
  %2753 = vrot.lane.b32.xlu0 %v2694, 96
  %v2754 = vpop.permute.xlu0 %2753
  %2755 = vrot.lane.b32.xlu0 %v2695, 96
  %v2756 = vpop.permute.xlu0 %2755
  %2757 = vrot.lane.b32.xlu0 %v2696, 96
  %v2758 = vpop.permute.xlu0 %2757
  %2759 = vrot.lane.b32.xlu0 %v2697, 96
  %v2760 = vpop.permute.xlu0 %2759
  %2761 = vrot.lane.b32.xlu0 %v2698, 96
  %v2762 = vpop.permute.xlu0 %2761
  %2763 = vrot.lane.b32.xlu0 %v2699, 96
  %v2764 = vpop.permute.xlu0 %2763
  %2765 = vrot.lane.b32.xlu0 %v2700, 96
  %v2766 = vpop.permute.xlu0 %2765
  %2767 = vrot.lane.b32.xlu0 %v2701, 96
  %v2768 = vpop.permute.xlu0 %2767
  %2769 = vrot.lane.b32.xlu0 %v2702, 96
  %v2770 = vpop.permute.xlu0 %2769
  %2771 = vrot.lane.b32.xlu0 %v2703, 96
  %v2772 = vpop.permute.xlu0 %2771
  %2773 = vrot.lane.b32.xlu0 %v2704, 96
  %v2774 = vpop.permute.xlu0 %2773
  %2775 = vrot.lane.b32.xlu0 %v2705, 96
  %v2776 = vpop.permute.xlu0 %2775
  %2777 = vrot.lane.b32.xlu0 %v2706, 96
  %v2778 = vpop.permute.xlu0 %2777
  %v2803 = vmax.f32 %v2683, %v2732
  %v2804 = vmax.f32 %v2684, %v2734
  %v2805 = vmax.f32 %v2685, %v2736
  %v2806 = vmax.f32 %v2686, %v2738
  %v2807 = vmax.f32 %v2687, %v2740
  %v2808 = vmax.f32 %v2688, %v2742
  %v2809 = vmax.f32 %v2689, %v2744
  %v2810 = vmax.f32 %v2690, %v2746
  %v2811 = vmax.f32 %v2691, %v2748
  %v2812 = vmax.f32 %v2692, %v2750
  %v2813 = vmax.f32 %v2693, %v2752
  %v2814 = vmax.f32 %v2694, %v2754
  %v2815 = vmax.f32 %v2695, %v2756
  %v2816 = vmax.f32 %v2696, %v2758
  %v2817 = vmax.f32 %v2697, %v2760
  %v2818 = vmax.f32 %v2698, %v2762
  %v2819 = vmax.f32 %v2699, %v2764
  %v2820 = vmax.f32 %v2700, %v2766
  %v2821 = vmax.f32 %v2701, %v2768
  %v2822 = vmax.f32 %v2702, %v2770
  %v2823 = vmax.f32 %v2703, %v2772
  %v2824 = vmax.f32 %v2704, %v2774
  %v2825 = vmax.f32 %v2705, %v2776
  %v2826 = vmax.f32 %v2706, %v2778
  %v2827 = vld [vmem:[%s4] sm:$0x1]
  %v2829 = vlaneseq
  %v2830 = vshrl.u32 %v2829, 7
  %v2831 = vsub.s32 0, %v2830
  %v2832 = vrot.slane %v2827, %v2831
  %v2834 = vadd.f32 %v2803, %v2832
  %v2835 = vadd.f32 %v2804, %v2832
  %v2836 = vadd.f32 %v2805, %v2832
  %v2837 = vadd.f32 %v2806, %v2832
  %v2838 = vadd.f32 %v2807, %v2832
  %v2839 = vadd.f32 %v2808, %v2832
  %v2840 = vadd.f32 %v2809, %v2832
  %v2841 = vadd.f32 %v2810, %v2832
  %v2842 = vadd.f32 %v2811, %v2832
  %v2843 = vadd.f32 %v2812, %v2832
  %v2844 = vadd.f32 %v2813, %v2832
  %v2845 = vadd.f32 %v2814, %v2832
  %v2846 = vadd.f32 %v2815, %v2832
  %v2847 = vadd.f32 %v2816, %v2832
  %v2848 = vadd.f32 %v2817, %v2832
  %v2849 = vadd.f32 %v2818, %v2832
  %v2850 = vadd.f32 %v2819, %v2832
  %v2851 = vadd.f32 %v2820, %v2832
  %v2852 = vadd.f32 %v2821, %v2832
  %v2853 = vadd.f32 %v2822, %v2832
  %v2854 = vadd.f32 %v2823, %v2832
  %v2855 = vadd.f32 %v2824, %v2832
  %v2856 = vadd.f32 %v2825, %v2832
  %v2857 = vadd.f32 %v2826, %v2832
  %v2858 = vmax.f32 %v2834, 0.0
  %v2859 = vmax.f32 %v2835, 0.0
  %v2860 = vmax.f32 %v2836, 0.0
  %v2861 = vmax.f32 %v2837, 0.0
  %v2862 = vmax.f32 %v2838, 0.0
  %v2863 = vmax.f32 %v2839, 0.0
  %v2864 = vmax.f32 %v2840, 0.0
  %v2865 = vmax.f32 %v2841, 0.0
  %v2866 = vmax.f32 %v2842, 0.0
  %v2867 = vmax.f32 %v2843, 0.0
  %v2868 = vmax.f32 %v2844, 0.0
  %v2869 = vmax.f32 %v2845, 0.0
  %v2870 = vmax.f32 %v2846, 0.0
  %v2871 = vmax.f32 %v2847, 0.0
  %v2872 = vmax.f32 %v2848, 0.0
  %v2873 = vmax.f32 %v2849, 0.0
  %v2874 = vmax.f32 %v2850, 0.0
  %v2875 = vmax.f32 %v2851, 0.0
  %v2876 = vmax.f32 %v2852, 0.0
  %v2877 = vmax.f32 %v2853, 0.0
  %v2878 = vmax.f32 %v2854, 0.0
  %v2879 = vmax.f32 %v2855, 0.0
  %v2880 = vmax.f32 %v2856, 0.0
  %v2881 = vmax.f32 %v2857, 0.0
  %vm2882 = vcmask 130048
  %2883 = vst.msk [vmem:[%s5] sm:$0xff] %vm2882, %v2858
  %2884 = vst.msk [vmem:[%s5 + $0x8] sm:$0xff] %vm2882, %v2859
  %2885 = vst.msk [vmem:[%s5 + $0x10] sm:$0xff] %vm2882, %v2860
  %2886 = vst.msk [vmem:[%s5 + $0x18] sm:$0xff] %vm2882, %v2861
  %2887 = vst.msk [vmem:[%s5 + $0x20] sm:$0xff] %vm2882, %v2862
  %2888 = vst.msk [vmem:[%s5 + $0x28] sm:$0xff] %vm2882, %v2863
  %2889 = vst.msk [vmem:[%s5 + $0x30] sm:$0xff] %vm2882, %v2864
  %2890 = vst.msk [vmem:[%s5 + $0x38] sm:$0xff] %vm2882, %v2865
  %2891 = vst.msk [vmem:[%s5 + $0x40] sm:$0xff] %vm2882, %v2866
  %2892 = vst.msk [vmem:[%s5 + $0x48] sm:$0xff] %vm2882, %v2867
  %2893 = vst.msk [vmem:[%s5 + $0x50] sm:$0xff] %vm2882, %v2868
  %2894 = vst.msk [vmem:[%s5 + $0x58] sm:$0xff] %vm2882, %v2869
  %2895 = vst.msk [vmem:[%s5 + $0x60] sm:$0xff] %vm2882, %v2870
  %2896 = vst.msk [vmem:[%s5 + $0x68] sm:$0xff] %vm2882, %v2871
  %2897 = vst.msk [vmem:[%s5 + $0x70] sm:$0xff] %vm2882, %v2872
  %2898 = vst.msk [vmem:[%s5 + $0x78] sm:$0xff] %vm2882, %v2873
  %2899 = vst.msk [vmem:[%s5 + $0x80] sm:$0xff] %vm2882, %v2874
  %2900 = vst.msk [vmem:[%s5 + $0x88] sm:$0xff] %vm2882, %v2875
  %2901 = vst.msk [vmem:[%s5 + $0x90] sm:$0xff] %vm2882, %v2876
  %2902 = vst.msk [vmem:[%s5 + $0x98] sm:$0xff] %vm2882, %v2877
  %2903 = vst.msk [vmem:[%s5 + $0xa0] sm:$0xff] %vm2882, %v2878
  %2904 = vst.msk [vmem:[%s5 + $0xa8] sm:$0xff] %vm2882, %v2879
  %2905 = vst.msk [vmem:[%s5 + $0xb0] sm:$0xff] %vm2882, %v2880
  %2906 = vst.msk [vmem:[%s5 + $0xb8] sm:$0xff] %vm2882, %v2881
  // Predicated region
  $region22: #{cnn_forward.1} parent=0 // pred_check
    _
  $region23: #{cnn_forward.1} parent=0 // pred_check_branch
    %2908 = sbr.rel (0) target = $region25
  $region24: #{cnn_forward.1} parent=0 // pred_region
    _
  $region25: #{cnn_forward.1} parent=0 // pred_fallthru
    _
  // Predicated region
  $region26: #{cnn_forward.1} parent=0 // pred_check
    _
  $region27: #{cnn_forward.1} parent=0 // pred_check_branch
    %2910 = sbr.rel (0) target = $region29
  $region28: #{cnn_forward.1} parent=0 // pred_region
    _
  $region29: #{cnn_forward.1} parent=0 // pred_fallthru
    _

</llo_original>
